<compile_context>
chip_gen: v7x
topology: tpu7x:2x2x1
jax: 0.10.0
libtpu: 0.0.40
codegen_flags: <defaults>
</compile_context>

<pallas_src>
import math

import jax
import jax.numpy as jnp
from jax.experimental import pallas as pl
from jax.experimental.pallas import tpu as pltpu

K = 5          # conv1 / conv2 kernel size
BN_EPS = 1e-5  # PyTorch BatchNorm1d default eps


# ---------------------------------------------------------------------------
# In-kernel math helpers
# ---------------------------------------------------------------------------
def _bn_train(x2d, gamma, beta, n_rows):
    """Training-mode BatchNorm1d on a channels-last (rows, C) slab.

    Two-pass (mean, then E[(x-mean)^2]) like PyTorch -- avoids the
    catastrophic-cancellation risk of the sumsq/n - mean^2 form.  The
    gamma*rsqrt(var+eps) scale is folded so normalize is one FMA.
    """
    inv_n = 1.0 / n_rows
    mean = jnp.sum(x2d, axis=0, keepdims=True) * inv_n
    xc = x2d - mean
    var = jnp.sum(xc * xc, axis=0, keepdims=True) * inv_n     # biased variance
    return xc * (gamma * jax.lax.rsqrt(var + BN_EPS)) + beta


def _make_kernel(B, T, n_in, n_hid, n_out):
    L1 = T - K + 1        # after conv1 (valid)
    L2 = L1 // 2          # after maxpool (floor mode)
    L3 = L2 - K + 1       # after conv2 (valid)
    assert L3 >= 1, f"sequence too short: T={T} -> L3={L3}"

    def tap_conv(src3, w_ref, bias, l_out, cin):
        # Valid conv1d as K tap-accumulated 2-D matmuls (no lane-axis im2col
        # concat; contraction per tap is only cin, but the MXU is idle anyway).
        acc = bias + jnp.dot(src3[:, 0:l_out, :].reshape(B * l_out, cin),
                             w_ref[0], preferred_element_type=jnp.float32)
        for k in range(1, K):
            acc = acc + jnp.dot(src3[:, k:k + l_out, :].reshape(B * l_out, cin),
                                w_ref[k], preferred_element_type=jnp.float32)
        return acc

    def kernel(x_ref, w1_ref, w2_ref, wpa_ref, vecs_ref, out_ref):
        vecs = vecs_ref[...]                              # (8, W) packed vectors
        b1, g1, be1 = vecs[0:1, :n_hid], vecs[1:2, :n_hid], vecs[2:3, :n_hid]
        b2, g2, be2 = vecs[3:4, :n_hid], vecs[4:5, :n_hid], vecs[5:6, :n_hid]
        bpa = vecs[6:7, :n_out + 1]

        x3 = x_ref[...]                                   # (B, T, n_in)

        # ---- conv1 -> relu -> BatchNorm1d (training batch stats) ----
        h = tap_conv(x3, w1_ref, b1, L1, n_in)            # (B*L1, n_hid)
        h = jnp.maximum(h, 0.0)
        h = _bn_train(h, g1, be1, B * L1)
        # dropout(p=0.0) == identity
        # TODO(synk): stochastic dropout via pltpu.prng_* if do_prob > 0.

        # ---- maxpool1d(kernel=2, stride=2), floor mode ----
        # TODO(synk): even/odd strided-view maximum would avoid this single
        # sublane-regrouping reshape if strided value slices lower cleanly.
        h3 = h.reshape(B, L1, n_hid)[:, :2 * L2, :]
        hp = jnp.max(h3.reshape(B * L2, 2, n_hid), axis=1)    # (B*L2, n_hid)

        # ---- conv2 -> relu -> BatchNorm1d ----
        h2 = tap_conv(hp.reshape(B, L2, n_hid), w2_ref, b2, L3, n_hid)
        h2 = jnp.maximum(h2, 0.0)
        h2 = _bn_train(h2, g2, be2, B * L3)               # (B*L3, n_hid)

        # ---- fused pred|attention 1x1-conv head: one MXU pass ----
        heads = jnp.dot(h2, wpa_ref[...],
                        preferred_element_type=jnp.float32) + bpa
        pred = heads[:, :n_out].reshape(B, L3, n_out)
        logit = heads[:, n_out:n_out + 1].reshape(B, L3, 1)

        # softmax over the length axis, then mean_L(pred * attention).
        m = jnp.max(logit, axis=1, keepdims=True)
        e = jnp.exp(logit - m)
        attn = e / jnp.sum(e, axis=1, keepdims=True)      # exact divide (parity)
        out_ref[...] = (jnp.sum(pred * attn, axis=1) * (1.0 / L3)
                        ).astype(out_ref.dtype)
        # TODO(synk): for large B emit a lane-dense output slab instead of the
        # (B, n_out) masked partial store.

    return kernel


def _vmem_limit_bytes(B, T, n_in, n_hid, n_out):
    """Explicit VMEM budget from the real working set (+headroom)."""
    L1 = T - K + 1
    L2 = L1 // 2
    L3 = L2 - K + 1
    acts = (B * T * n_in
            + 3 * B * L1 * n_hid      # conv1 out + relu/BN temporaries
            + 2 * B * L2 * n_hid      # pooled
            + 3 * B * L3 * n_hid      # conv2 out + BN
            + 2 * B * L3 * (n_out + 1))
    weights = (K * n_in * n_hid + K * n_hid * n_hid
               + n_hid * (n_out + 1) + 8 * max(n_hid, n_out + 1))
    need = 2 * (acts + weights) * 4 + (16 << 20)   # 2x headroom + 16 MiB floor
    return min(need, 64 << 20)                     # v7x physical VMEM ceiling


# ---------------------------------------------------------------------------
# Wrapper
# ---------------------------------------------------------------------------
def cnn_forward(x_ncl, params):
    """x_ncl: (B, n_in, T) float32 in PyTorch NCL layout.  Returns (B, n_out)."""
    B, n_in, T = x_ncl.shape
    n_hid = params["w1"].shape[0]
    n_out = params["wp"].shape[0]

    # NCL -> NLC.  TODO(synk): accept channels-last input (or move this swap
    # in-kernel) to avoid the extra HBM pass over x when B*T is large.
    x_nlc = jnp.transpose(x_ncl, (0, 2, 1)).astype(jnp.float32)

    # Kernel-friendly weight layouts: tap-major (K, Cin, Cout) conv weights,
    # fused pred|attention head, and every per-channel vector packed into one
    # (8, W) slab -- 5 input DMAs instead of 13.
    w1 = jnp.transpose(params["w1"], (2, 1, 0)).astype(jnp.float32)   # (K, n_in, n_hid)
    w2 = jnp.transpose(params["w2"], (2, 1, 0)).astype(jnp.float32)   # (K, n_hid, n_hid)
    wpa = jnp.concatenate([params["wp"][:, :, 0].T,
                           params["wa"][:, :, 0].T], axis=1).astype(jnp.float32)
    bpa = jnp.concatenate([params["bp"], params["ba"]]).astype(jnp.float32)

    W = max(n_hid, n_out + 1)

    def row(v):
        v = v.astype(jnp.float32)
        return jnp.pad(v, (0, W - v.shape[0]))

    vecs = jnp.stack([row(params["b1"]), row(params["g1"]), row(params["be1"]),
                      row(params["b2"]), row(params["g2"]), row(params["be2"]),
                      row(bpa), jnp.zeros((W,), jnp.float32)])        # (8, W)

    kernel = _make_kernel(B, T, n_in, n_hid, n_out)
    vmem = pl.BlockSpec(memory_space=pltpu.MemorySpace.VMEM)
    return pl.pallas_call(
        kernel,
        out_shape=jax.ShapeDtypeStruct((B, n_out), jnp.float32),
        in_specs=[vmem] * 5,
        out_specs=vmem,
        compiler_params=pltpu.CompilerParams(
            vmem_limit_bytes=_vmem_limit_bytes(B, T, n_in, n_hid, n_out)),
    )(x_nlc, w1, w2, wpa, vecs)


# ---------------------------------------------------------------------------
# Deterministic parameter init (mirrors CNN.init_weights, PyTorch layouts)
# ---------------------------------------------------------------------------
def init_params(key, n_in, n_hid, n_out):
    k1, k2, k3, k4 = jax.random.split(key, 4)

    def conv_w(k, out_c, in_c, ksize):
        std = math.sqrt(2.0 / (ksize * out_c))
        return std * jax.random.normal(k, (out_c, in_c, ksize), jnp.float32)

    return dict(
        w1=conv_w(k1, n_hid, n_in, K),  b1=jnp.full((n_hid,), 0.1, jnp.float32),
        g1=jnp.ones((n_hid,), jnp.float32), be1=jnp.zeros((n_hid,), jnp.float32),
        w2=conv_w(k2, n_hid, n_hid, K), b2=jnp.full((n_hid,), 0.1, jnp.float32),
        g2=jnp.ones((n_hid,), jnp.float32), be2=jnp.zeros((n_hid,), jnp.float32),
        wp=conv_w(k3, n_out, n_hid, 1), bp=jnp.full((n_out,), 0.1, jnp.float32),
        wa=conv_w(k4, 1, n_hid, 1),     ba=jnp.full((1,), 0.1, jnp.float32),
    )


# ---------------------------------------------------------------------------
# Independent pure-JAX reference (lax.conv_general_dilated), PyTorch semantics
# ---------------------------------------------------------------------------
def cnn_reference(x, p):
    def conv1d(x, w, b):                       # x (B,C,L), w (O,I,K), b (O,)
        y = jax.lax.conv_general_dilated(
            x, w, window_strides=(1,), padding="VALID",
            dimension_numbers=("NCH", "OIH", "NCH"))
        return y + b[None, :, None]

    def bn(x, gamma, beta):                    # training-mode batch stats
        mean = jnp.mean(x, axis=(0, 2), keepdims=True)
        var = jnp.mean((x - mean) ** 2, axis=(0, 2), keepdims=True)
        return ((x - mean) * (gamma[None, :, None] * jax.lax.rsqrt(var + BN_EPS))
                + beta[None, :, None])

    x = x.astype(jnp.float32)
    h = bn(jax.nn.relu(conv1d(x, p["w1"], p["b1"])), p["g1"], p["be1"])
    B, C, L1 = h.shape
    L2 = L1 // 2
    h = jnp.max(h[:, :, :2 * L2].reshape(B, C, L2, 2), axis=-1)   # maxpool k=2,s=2
    h = bn(jax.nn.relu(conv1d(h, p["w2"], p["b2"])), p["g2"], p["be2"])
    pred = conv1d(h, p["wp"], p["bp"])                            # (B, n_out, L3)
    attn = jax.nn.softmax(conv1d(h, p["wa"], p["ba"]), axis=2)    # (B, 1, L3)
    return jnp.mean(pred * attn, axis=2)                          # (B, n_out)


if __name__ == "__main__":
    B, n_in, n_hid, n_out, T = 2, 4, 32, 8, 16
    key = jax.random.PRNGKey(0)
    kx, kp = jax.random.split(key)
    x = jax.random.normal(kx, (B, n_in, T), jnp.float32)   # PyTorch NCL input
    params = init_params(kp, n_in, n_hid, n_out)

    out = jax.block_until_ready(cnn_forward(x, params))
    ref = jax.block_until_ready(cnn_reference(x, params))

    assert out.shape == (B, n_out), out.shape
    # Exact softmax divide in-kernel; tolerance only absorbs summation-order
    # differences between the fused kernel and the lax.conv reference.
    assert jnp.allclose(out, ref, atol=2e-3, rtol=2e-3), (out, ref)
    print("KERNEL_OK")
</pallas_src>

<mosaic_0001>
module attributes {stable_mosaic.version = 11 : i64} {
  func.func @kernel(%arg0: memref<2x16x4xf32, #tpu.memory_space<vmem>>, %arg1: memref<5x4x32xf32, #tpu.memory_space<vmem>>, %arg2: memref<5x32x32xf32, #tpu.memory_space<vmem>>, %arg3: memref<32x9xf32, #tpu.memory_space<vmem>>, %arg4: memref<8x32xf32, #tpu.memory_space<vmem>>, %arg5: memref<2x8xf32, #tpu.memory_space<vmem>>) attributes {dimension_semantics = [], scalar_prefetch = 0 : i64, scratch_operands = 0 : i64, tpu.core_type = #tpu.core_type<tc>} {
    %c0 = arith.constant 0 : index
    %c0_0 = arith.constant 0 : index
    %0 = vector.load %arg4[%c0, %c0_0] : memref<8x32xf32, #tpu.memory_space<vmem>>, vector<8x32xf32>
    %1 = vector.extract_strided_slice %0 {offsets = [0, 0], sizes = [1, 32], strides = [1, 1]} : vector<8x32xf32> to vector<1x32xf32>
    %2 = vector.extract_strided_slice %0 {offsets = [1, 0], sizes = [1, 32], strides = [1, 1]} : vector<8x32xf32> to vector<1x32xf32>
    %3 = vector.extract_strided_slice %0 {offsets = [2, 0], sizes = [1, 32], strides = [1, 1]} : vector<8x32xf32> to vector<1x32xf32>
    %4 = vector.extract_strided_slice %0 {offsets = [3, 0], sizes = [1, 32], strides = [1, 1]} : vector<8x32xf32> to vector<1x32xf32>
    %5 = vector.extract_strided_slice %0 {offsets = [4, 0], sizes = [1, 32], strides = [1, 1]} : vector<8x32xf32> to vector<1x32xf32>
    %6 = vector.extract_strided_slice %0 {offsets = [5, 0], sizes = [1, 32], strides = [1, 1]} : vector<8x32xf32> to vector<1x32xf32>
    %7 = vector.extract_strided_slice %0 {offsets = [6, 0], sizes = [1, 9], strides = [1, 1]} : vector<8x32xf32> to vector<1x9xf32>
    %c0_1 = arith.constant 0 : index
    %c0_2 = arith.constant 0 : index
    %c0_3 = arith.constant 0 : index
    %8 = vector.load %arg0[%c0_1, %c0_2, %c0_3] : memref<2x16x4xf32, #tpu.memory_space<vmem>>, vector<2x16x4xf32>
    %9 = vector.extract_strided_slice %8 {offsets = [0, 0, 0], sizes = [2, 12, 4], strides = [1, 1, 1]} : vector<2x16x4xf32> to vector<2x12x4xf32>
    %10 = vector.shape_cast %9 : vector<2x12x4xf32> to vector<24x4xf32>
    %c0_4 = arith.constant 0 : index
    %c0_5 = arith.constant 0 : index
    %c0_6 = arith.constant 0 : index
    %11 = vector.load %arg1[%c0_4, %c0_5, %c0_6] : memref<5x4x32xf32, #tpu.memory_space<vmem>>, vector<1x4x32xf32>
    %12 = vector.shape_cast %11 : vector<1x4x32xf32> to vector<4x32xf32>
    %cst = arith.constant dense<0.000000e+00> : vector<24x32xf32>
    %13 = tpu.matmul %10, %12, %cst {dimension_numbers = #tpu.dot_dimension_numbers<[1], [0], [0], [1], [0, 0, 1, 1], [], []>} : vector<24x4xf32>, vector<4x32xf32>, vector<24x32xf32> -> vector<24x32xf32>
    %14 = vector.broadcast %1 : vector<1x32xf32> to vector<24x32xf32>
    %15 = arith.addf %14, %13 : vector<24x32xf32>
    %16 = vector.extract_strided_slice %8 {offsets = [0, 1, 0], sizes = [2, 12, 4], strides = [1, 1, 1]} : vector<2x16x4xf32> to vector<2x12x4xf32>
    %17 = vector.shape_cast %16 : vector<2x12x4xf32> to vector<24x4xf32>
    %c1 = arith.constant 1 : index
    %c0_7 = arith.constant 0 : index
    %c0_8 = arith.constant 0 : index
    %18 = vector.load %arg1[%c1, %c0_7, %c0_8] : memref<5x4x32xf32, #tpu.memory_space<vmem>>, vector<1x4x32xf32>
    %19 = vector.shape_cast %18 : vector<1x4x32xf32> to vector<4x32xf32>
    %cst_9 = arith.constant dense<0.000000e+00> : vector<24x32xf32>
    %20 = tpu.matmul %17, %19, %cst_9 {dimension_numbers = #tpu.dot_dimension_numbers<[1], [0], [0], [1], [0, 0, 1, 1], [], []>} : vector<24x4xf32>, vector<4x32xf32>, vector<24x32xf32> -> vector<24x32xf32>
    %21 = arith.addf %15, %20 : vector<24x32xf32>
    %22 = vector.extract_strided_slice %8 {offsets = [0, 2, 0], sizes = [2, 12, 4], strides = [1, 1, 1]} : vector<2x16x4xf32> to vector<2x12x4xf32>
    %23 = vector.shape_cast %22 : vector<2x12x4xf32> to vector<24x4xf32>
    %c2 = arith.constant 2 : index
    %c0_10 = arith.constant 0 : index
    %c0_11 = arith.constant 0 : index
    %24 = vector.load %arg1[%c2, %c0_10, %c0_11] : memref<5x4x32xf32, #tpu.memory_space<vmem>>, vector<1x4x32xf32>
    %25 = vector.shape_cast %24 : vector<1x4x32xf32> to vector<4x32xf32>
    %cst_12 = arith.constant dense<0.000000e+00> : vector<24x32xf32>
    %26 = tpu.matmul %23, %25, %cst_12 {dimension_numbers = #tpu.dot_dimension_numbers<[1], [0], [0], [1], [0, 0, 1, 1], [], []>} : vector<24x4xf32>, vector<4x32xf32>, vector<24x32xf32> -> vector<24x32xf32>
    %27 = arith.addf %21, %26 : vector<24x32xf32>
    %28 = vector.extract_strided_slice %8 {offsets = [0, 3, 0], sizes = [2, 12, 4], strides = [1, 1, 1]} : vector<2x16x4xf32> to vector<2x12x4xf32>
    %29 = vector.shape_cast %28 : vector<2x12x4xf32> to vector<24x4xf32>
    %c3 = arith.constant 3 : index
    %c0_13 = arith.constant 0 : index
    %c0_14 = arith.constant 0 : index
    %30 = vector.load %arg1[%c3, %c0_13, %c0_14] : memref<5x4x32xf32, #tpu.memory_space<vmem>>, vector<1x4x32xf32>
    %31 = vector.shape_cast %30 : vector<1x4x32xf32> to vector<4x32xf32>
    %cst_15 = arith.constant dense<0.000000e+00> : vector<24x32xf32>
    %32 = tpu.matmul %29, %31, %cst_15 {dimension_numbers = #tpu.dot_dimension_numbers<[1], [0], [0], [1], [0, 0, 1, 1], [], []>} : vector<24x4xf32>, vector<4x32xf32>, vector<24x32xf32> -> vector<24x32xf32>
    %33 = arith.addf %27, %32 : vector<24x32xf32>
    %34 = vector.extract_strided_slice %8 {offsets = [0, 4, 0], sizes = [2, 12, 4], strides = [1, 1, 1]} : vector<2x16x4xf32> to vector<2x12x4xf32>
    %35 = vector.shape_cast %34 : vector<2x12x4xf32> to vector<24x4xf32>
    %c4 = arith.constant 4 : index
    %c0_16 = arith.constant 0 : index
    %c0_17 = arith.constant 0 : index
    %36 = vector.load %arg1[%c4, %c0_16, %c0_17] : memref<5x4x32xf32, #tpu.memory_space<vmem>>, vector<1x4x32xf32>
    %37 = vector.shape_cast %36 : vector<1x4x32xf32> to vector<4x32xf32>
    %cst_18 = arith.constant dense<0.000000e+00> : vector<24x32xf32>
    %38 = tpu.matmul %35, %37, %cst_18 {dimension_numbers = #tpu.dot_dimension_numbers<[1], [0], [0], [1], [0, 0, 1, 1], [], []>} : vector<24x4xf32>, vector<4x32xf32>, vector<24x32xf32> -> vector<24x32xf32>
    %39 = arith.addf %33, %38 : vector<24x32xf32>
    %cst_19 = arith.constant 0.000000e+00 : f32
    %40 = vector.broadcast %cst_19 : f32 to vector<24x32xf32>
    %41 = arith.maximumf %39, %40 : vector<24x32xf32>
    %cst_20 = arith.constant dense<0.000000e+00> : vector<32xf32>
    %42 = vector.multi_reduction <add>, %41, %cst_20 [0] : vector<24x32xf32> to vector<32xf32>
    %43 = vector.shape_cast %42 : vector<32xf32> to vector<1x32xf32>
    %cst_21 = arith.constant 0.0416666679 : f32
    %44 = vector.broadcast %cst_21 : f32 to vector<1x32xf32>
    %45 = arith.mulf %43, %44 : vector<1x32xf32>
    %46 = vector.broadcast %45 : vector<1x32xf32> to vector<24x32xf32>
    %47 = arith.subf %41, %46 : vector<24x32xf32>
    %48 = arith.mulf %47, %47 : vector<24x32xf32>
    %cst_22 = arith.constant dense<0.000000e+00> : vector<32xf32>
    %49 = vector.multi_reduction <add>, %48, %cst_22 [0] : vector<24x32xf32> to vector<32xf32>
    %50 = vector.shape_cast %49 : vector<32xf32> to vector<1x32xf32>
    %cst_23 = arith.constant 0.0416666679 : f32
    %51 = vector.broadcast %cst_23 : f32 to vector<1x32xf32>
    %52 = arith.mulf %50, %51 : vector<1x32xf32>
    %cst_24 = arith.constant 9.99999974E-6 : f32
    %53 = vector.broadcast %cst_24 : f32 to vector<1x32xf32>
    %54 = arith.addf %52, %53 : vector<1x32xf32>
    %55 = math.rsqrt %54 : vector<1x32xf32>
    %56 = arith.mulf %2, %55 : vector<1x32xf32>
    %57 = vector.broadcast %56 : vector<1x32xf32> to vector<24x32xf32>
    %58 = arith.mulf %47, %57 : vector<24x32xf32>
    %59 = vector.broadcast %3 : vector<1x32xf32> to vector<24x32xf32>
    %60 = arith.addf %58, %59 : vector<24x32xf32>
    %61 = vector.shape_cast %60 : vector<24x32xf32> to vector<2x12x32xf32>
    %62 = vector.shape_cast %61 : vector<2x12x32xf32> to vector<12x2x32xf32>
    %cst_25 = arith.constant dense<0xFF800000> : vector<12x32xf32>
    %63 = vector.multi_reduction <maximumf>, %62, %cst_25 [1] : vector<12x2x32xf32> to vector<12x32xf32>
    %64 = vector.shape_cast %63 : vector<12x32xf32> to vector<2x6x32xf32>
    %65 = vector.extract_strided_slice %64 {offsets = [0, 0, 0], sizes = [2, 2, 32], strides = [1, 1, 1]} : vector<2x6x32xf32> to vector<2x2x32xf32>
    %66 = vector.shape_cast %65 : vector<2x2x32xf32> to vector<4x32xf32>
    %c0_26 = arith.constant 0 : index
    %c0_27 = arith.constant 0 : index
    %c0_28 = arith.constant 0 : index
    %67 = vector.load %arg2[%c0_26, %c0_27, %c0_28] : memref<5x32x32xf32, #tpu.memory_space<vmem>>, vector<1x32x32xf32>
    %68 = vector.shape_cast %67 : vector<1x32x32xf32> to vector<32x32xf32>
    %cst_29 = arith.constant dense<0.000000e+00> : vector<4x32xf32>
    %69 = tpu.matmul %66, %68, %cst_29 {dimension_numbers = #tpu.dot_dimension_numbers<[1], [0], [0], [1], [0, 0, 1, 1], [], []>} : vector<4x32xf32>, vector<32x32xf32>, vector<4x32xf32> -> vector<4x32xf32>
    %70 = vector.broadcast %4 : vector<1x32xf32> to vector<4x32xf32>
    %71 = arith.addf %70, %69 : vector<4x32xf32>
    %72 = vector.extract_strided_slice %64 {offsets = [0, 1, 0], sizes = [2, 2, 32], strides = [1, 1, 1]} : vector<2x6x32xf32> to vector<2x2x32xf32>
    %73 = vector.shape_cast %72 : vector<2x2x32xf32> to vector<4x32xf32>
    %c1_30 = arith.constant 1 : index
    %c0_31 = arith.constant 0 : index
    %c0_32 = arith.constant 0 : index
    %74 = vector.load %arg2[%c1_30, %c0_31, %c0_32] : memref<5x32x32xf32, #tpu.memory_space<vmem>>, vector<1x32x32xf32>
    %75 = vector.shape_cast %74 : vector<1x32x32xf32> to vector<32x32xf32>
    %cst_33 = arith.constant dense<0.000000e+00> : vector<4x32xf32>
    %76 = tpu.matmul %73, %75, %cst_33 {dimension_numbers = #tpu.dot_dimension_numbers<[1], [0], [0], [1], [0, 0, 1, 1], [], []>} : vector<4x32xf32>, vector<32x32xf32>, vector<4x32xf32> -> vector<4x32xf32>
    %77 = arith.addf %71, %76 : vector<4x32xf32>
    %78 = vector.extract_strided_slice %64 {offsets = [0, 2, 0], sizes = [2, 2, 32], strides = [1, 1, 1]} : vector<2x6x32xf32> to vector<2x2x32xf32>
    %79 = vector.shape_cast %78 : vector<2x2x32xf32> to vector<4x32xf32>
    %c2_34 = arith.constant 2 : index
    %c0_35 = arith.constant 0 : index
    %c0_36 = arith.constant 0 : index
    %80 = vector.load %arg2[%c2_34, %c0_35, %c0_36] : memref<5x32x32xf32, #tpu.memory_space<vmem>>, vector<1x32x32xf32>
    %81 = vector.shape_cast %80 : vector<1x32x32xf32> to vector<32x32xf32>
    %cst_37 = arith.constant dense<0.000000e+00> : vector<4x32xf32>
    %82 = tpu.matmul %79, %81, %cst_37 {dimension_numbers = #tpu.dot_dimension_numbers<[1], [0], [0], [1], [0, 0, 1, 1], [], []>} : vector<4x32xf32>, vector<32x32xf32>, vector<4x32xf32> -> vector<4x32xf32>
    %83 = arith.addf %77, %82 : vector<4x32xf32>
    %84 = vector.extract_strided_slice %64 {offsets = [0, 3, 0], sizes = [2, 2, 32], strides = [1, 1, 1]} : vector<2x6x32xf32> to vector<2x2x32xf32>
    %85 = vector.shape_cast %84 : vector<2x2x32xf32> to vector<4x32xf32>
    %c3_38 = arith.constant 3 : index
    %c0_39 = arith.constant 0 : index
    %c0_40 = arith.constant 0 : index
    %86 = vector.load %arg2[%c3_38, %c0_39, %c0_40] : memref<5x32x32xf32, #tpu.memory_space<vmem>>, vector<1x32x32xf32>
    %87 = vector.shape_cast %86 : vector<1x32x32xf32> to vector<32x32xf32>
    %cst_41 = arith.constant dense<0.000000e+00> : vector<4x32xf32>
    %88 = tpu.matmul %85, %87, %cst_41 {dimension_numbers = #tpu.dot_dimension_numbers<[1], [0], [0], [1], [0, 0, 1, 1], [], []>} : vector<4x32xf32>, vector<32x32xf32>, vector<4x32xf32> -> vector<4x32xf32>
    %89 = arith.addf %83, %88 : vector<4x32xf32>
    %90 = vector.extract_strided_slice %64 {offsets = [0, 4, 0], sizes = [2, 2, 32], strides = [1, 1, 1]} : vector<2x6x32xf32> to vector<2x2x32xf32>
    %91 = vector.shape_cast %90 : vector<2x2x32xf32> to vector<4x32xf32>
    %c4_42 = arith.constant 4 : index
    %c0_43 = arith.constant 0 : index
    %c0_44 = arith.constant 0 : index
    %92 = vector.load %arg2[%c4_42, %c0_43, %c0_44] : memref<5x32x32xf32, #tpu.memory_space<vmem>>, vector<1x32x32xf32>
    %93 = vector.shape_cast %92 : vector<1x32x32xf32> to vector<32x32xf32>
    %cst_45 = arith.constant dense<0.000000e+00> : vector<4x32xf32>
    %94 = tpu.matmul %91, %93, %cst_45 {dimension_numbers = #tpu.dot_dimension_numbers<[1], [0], [0], [1], [0, 0, 1, 1], [], []>} : vector<4x32xf32>, vector<32x32xf32>, vector<4x32xf32> -> vector<4x32xf32>
    %95 = arith.addf %89, %94 : vector<4x32xf32>
    %cst_46 = arith.constant 0.000000e+00 : f32
    %96 = vector.broadcast %cst_46 : f32 to vector<4x32xf32>
    %97 = arith.maximumf %95, %96 : vector<4x32xf32>
    %cst_47 = arith.constant dense<0.000000e+00> : vector<32xf32>
    %98 = vector.multi_reduction <add>, %97, %cst_47 [0] : vector<4x32xf32> to vector<32xf32>
    %99 = vector.shape_cast %98 : vector<32xf32> to vector<1x32xf32>
    %cst_48 = arith.constant 2.500000e-01 : f32
    %100 = vector.broadcast %cst_48 : f32 to vector<1x32xf32>
    %101 = arith.mulf %99, %100 : vector<1x32xf32>
    %102 = vector.broadcast %101 : vector<1x32xf32> to vector<4x32xf32>
    %103 = arith.subf %97, %102 : vector<4x32xf32>
    %104 = arith.mulf %103, %103 : vector<4x32xf32>
    %cst_49 = arith.constant dense<0.000000e+00> : vector<32xf32>
    %105 = vector.multi_reduction <add>, %104, %cst_49 [0] : vector<4x32xf32> to vector<32xf32>
    %106 = vector.shape_cast %105 : vector<32xf32> to vector<1x32xf32>
    %cst_50 = arith.constant 2.500000e-01 : f32
    %107 = vector.broadcast %cst_50 : f32 to vector<1x32xf32>
    %108 = arith.mulf %106, %107 : vector<1x32xf32>
    %cst_51 = arith.constant 9.99999974E-6 : f32
    %109 = vector.broadcast %cst_51 : f32 to vector<1x32xf32>
    %110 = arith.addf %108, %109 : vector<1x32xf32>
    %111 = math.rsqrt %110 : vector<1x32xf32>
    %112 = arith.mulf %5, %111 : vector<1x32xf32>
    %113 = vector.broadcast %112 : vector<1x32xf32> to vector<4x32xf32>
    %114 = arith.mulf %103, %113 : vector<4x32xf32>
    %115 = vector.broadcast %6 : vector<1x32xf32> to vector<4x32xf32>
    %116 = arith.addf %114, %115 : vector<4x32xf32>
    %c0_52 = arith.constant 0 : index
    %c0_53 = arith.constant 0 : index
    %117 = vector.load %arg3[%c0_52, %c0_53] : memref<32x9xf32, #tpu.memory_space<vmem>>, vector<32x9xf32>
    %cst_54 = arith.constant dense<0.000000e+00> : vector<4x9xf32>
    %118 = tpu.matmul %116, %117, %cst_54 {dimension_numbers = #tpu.dot_dimension_numbers<[1], [0], [0], [1], [0, 0, 1, 1], [], []>} : vector<4x32xf32>, vector<32x9xf32>, vector<4x9xf32> -> vector<4x9xf32>
    %119 = vector.broadcast %7 : vector<1x9xf32> to vector<4x9xf32>
    %120 = arith.addf %118, %119 : vector<4x9xf32>
    %121 = vector.extract_strided_slice %120 {offsets = [0, 0], sizes = [4, 8], strides = [1, 1]} : vector<4x9xf32> to vector<4x8xf32>
    %122 = vector.shape_cast %121 : vector<4x8xf32> to vector<2x2x8xf32>
    %123 = vector.extract_strided_slice %120 {offsets = [0, 8], sizes = [4, 1], strides = [1, 1]} : vector<4x9xf32> to vector<4x1xf32>
    %124 = vector.shape_cast %123 : vector<4x1xf32> to vector<2x2x1xf32>
    %cst_55 = arith.constant dense<0xFF800000> : vector<2x1xf32>
    %125 = vector.multi_reduction <maximumf>, %124, %cst_55 [1] : vector<2x2x1xf32> to vector<2x1xf32>
    %126 = vector.shape_cast %125 : vector<2x1xf32> to vector<2x1x1xf32>
    %127 = vector.broadcast %126 : vector<2x1x1xf32> to vector<2x2x1xf32>
    %128 = arith.subf %124, %127 : vector<2x2x1xf32>
    %129 = math.exp %128 : vector<2x2x1xf32>
    %cst_56 = arith.constant dense<0.000000e+00> : vector<2x1xf32>
    %130 = vector.multi_reduction <add>, %129, %cst_56 [1] : vector<2x2x1xf32> to vector<2x1xf32>
    %131 = vector.shape_cast %130 : vector<2x1xf32> to vector<2x1x1xf32>
    %132 = vector.broadcast %131 : vector<2x1x1xf32> to vector<2x2x1xf32>
    %133 = arith.divf %129, %132 : vector<2x2x1xf32>
    %134 = vector.broadcast %133 : vector<2x2x1xf32> to vector<2x2x8xf32>
    %135 = arith.mulf %122, %134 : vector<2x2x8xf32>
    %cst_57 = arith.constant dense<0.000000e+00> : vector<2x8xf32>
    %136 = vector.multi_reduction <add>, %135, %cst_57 [1] : vector<2x2x8xf32> to vector<2x8xf32>
    %cst_58 = arith.constant 5.000000e-01 : f32
    %137 = vector.broadcast %cst_58 : f32 to vector<2x8xf32>
    %138 = arith.mulf %136, %137 : vector<2x8xf32>
    %c0_59 = arith.constant 0 : index
    %c0_60 = arith.constant 0 : index
    %139 = vector.load %arg5[%c0_59, %c0_60] : memref<2x8xf32, #tpu.memory_space<vmem>>, vector<2x8xf32>
    tpu.vector_store %arg5[%c0_59, %c0_60], %138 {strides = array<i32>} : memref<2x8xf32, #tpu.memory_space<vmem>>, vector<2x8xf32>,
    return
  }
}

</mosaic_0001>

<llo_original>
// kernel: tpu_custom_call.1
$region0: #{tpu_custom_call.1}
  #allocation0 [shape = 'u32[]', space=smem, size = 0x4, offset = 0x4, fixed_abs, tag = 'smem constant byte address 0x4 - core index']
  #allocation1 [shape = 'u32[144,128]{1,0:T(1,128)}', space=vmem, size = 0x12000, scoped, tag = 'internal scratch']
  %s0 = inlined_call_operand.vmem [shape: f32[2,16,4], index: 0, kind: input, shape index: {}]
  %s1 = inlined_call_operand.vmem [shape: f32[5,4,32], index: 1, kind: input, shape index: {}]
  %s2 = inlined_call_operand.hbm [shape: f32[5,32,32], index: 2, kind: input, shape index: {}]
  %s3 = inlined_call_operand.vmem [shape: f32[32,9], index: 3, kind: input, shape index: {}]
  %s4 = inlined_call_operand.vmem [shape: f32[8,32], index: 4, kind: input, shape index: {}]
  %s5 = inlined_call_operand.hbm [shape: f32[2,8], index: 5, kind: output, shape index: {}]
  %s6 = sld [smem:[#allocation0]]
  $region34: #{tpu_custom_call.1} parent=0
    _
  %s8 = ssub.s32 1, %s6
  %s9 = scalar_select 0, %s8, %s6
  $region1: #{tpu_custom_call.1} parent=0
    #allocation2 [shape = 'u8[81920]{0}', space=vmem, size = 0x14000, scoped, tag = 'input window, operand 2, single buffered']
    #allocation3 [shape = 's32[1]{0}', space=sflag, size = 0x4, scoped, tag = 'scoped memory for tpu_custom_call.1']
    #allocation4 [shape = 's32[1]{0}', space=sflag, size = 0x4, scoped, tag = 'scoped memory for tpu_custom_call.1']
    #allocation5 [shape = 'u8[1024]{0}', space=vmem, size = 0x400, scoped, tag = 'output window, operand 0, single buffered']
    %10 = vsyncpa [#allocation3], 0
    %11 = vsyncpa [#allocation4], 0
    // Predicated region
    $region2: #{tpu_custom_call.1} parent=1 // pred_check
      _
    $region3: #{tpu_custom_call.1} parent=1 // pred_check_branch
      %13 = sbr.rel (0) target = $region5
    $region4: #{tpu_custom_call.1} parent=1 // pred_region
      _
    $region5: #{tpu_custom_call.1} parent=1 // pred_fallthru
      _
    // Predicated region
    $region6: #{tpu_custom_call.1} parent=1 // pred_check
      _
    $region7: #{tpu_custom_call.1} parent=1 // pred_check_branch
      %15 = sbr.rel (0) target = $region9
    $region8: #{tpu_custom_call.1} parent=1 // pred_region
      _
    $region9: #{tpu_custom_call.1} parent=1 // pred_fallthru
      _
    // Predicated region
    $region10: #{tpu_custom_call.1} parent=1 // pred_check
      _
    $region11: #{tpu_custom_call.1} parent=1 // pred_check_branch
      %17 = sbr.rel (0) target = $region13
    $region12: #{tpu_custom_call.1} parent=1 // pred_region
      %s19 = ssub.s32 2560, 2560
      %20 = vsyncadd [#allocation3], %s19
      %s21 = sshll.u32 [#allocation2], 4
      %s22 = int_to_ptr.vmem [resolvable:$true] %s21
      %27 = dma.hbm_to_vmem [thread:$0]  %s2, 2560, %s22, [#allocation3], 128, 128, 8
    $region13: #{tpu_custom_call.1} parent=1 // pred_fallthru
      _
    // Predicated region
    $region14: #{tpu_custom_call.1} parent=1 // pred_check
      _
    $region15: #{tpu_custom_call.1} parent=1 // pred_check_branch
      %29 = sbr.rel (0) target = $region17
    $region16: #{tpu_custom_call.1} parent=1 // pred_region
      _
    $region17: #{tpu_custom_call.1} parent=1 // pred_fallthru
      _
    // Predicated region
    $region18: #{tpu_custom_call.1} parent=1 // pred_check
      _
    $region19: #{tpu_custom_call.1} parent=1 // pred_check_branch
      %31 = sbr.rel (0) target = $region21
    $region20: #{tpu_custom_call.1} parent=1 // pred_region
      _
    $region21: #{tpu_custom_call.1} parent=1 // pred_fallthru
      _
    // Predicated region
    $region22: #{tpu_custom_call.1} parent=1 // pred_check
      _
    $region23: #{tpu_custom_call.1} parent=1 // pred_check_branch
      %33 = sbr.rel (0) target = $region25
    $region24: #{tpu_custom_call.1} parent=1 // pred_region
      %34 = dma.done [#allocation3], 2560
    $region25: #{tpu_custom_call.1} parent=1 // pred_fallthru
      _
    %v35 = vld [vmem:[%s4] sm:$0xff]
    %v36 = vld [vmem:[%s0] sm:$0xff]
    %v37 = vld [vmem:[%s0 + $0x8] sm:$0xff]
    %v38 = vld [vmem:[%s0 + $0x10] sm:$0xff]
    %v39 = vld [vmem:[%s0 + $0x18] sm:$0xff]
    %v44 = vcombine.high %v36, %v36
    %v45 = vcombine.high %v38, %v38
    %v46 = vld [vmem:[%s1] sm:$0xf]
    %v47 = vcombine.low %v36, %v44
    %v48 = vcombine.low %v37, %v38
    %v49 = vcombine.low %v45, %v39
    %vm50 = vcmask 31744
    %v51 = vsel %vm50, %v47, 0
    %v53 = vsel %vm50, %v48, 0
    %v55 = vsel %vm50, %v49, 0
    %vm57 = vcmask 1043456
    %v59 = vsel %vm57, %v46, 0
    %61 = vmatprep.subr.mxu0 0.0
    %62 = vmatpush1.msra.mxu0 %v59
    %63 = vmatprep.subr.mxu0 0.0
    %64 = vmatpush1.msra.mxu0 0.0
    %65 = vmatprep.subr.mxu0 0.0
    %66 = vmatpush1.msra.mxu0 0.0
    %67 = vmatprep.subr.mxu0 0.0
    %68 = vmatpush1.msra.mxu0 0.0
    %69 = vmatprep.subr.mxu0 0.0
    %70 = vmatpush1.msra.mxu0 0.0
    %71 = vmatprep.subr.mxu0 0.0
    %72 = vmatpush1.msra.mxu0 0.0
    %73 = vmatprep.subr.mxu0 0.0
    %74 = vmatpush1.msra.mxu0 0.0
    %75 = vmatprep.subr.mxu0 0.0
    %76 = vmatpush1.msra.mxu0 0.0
    %77 = vmatprep.subr.mxu0 0.0
    %78 = vmatpush1.msra.mxu0 0.0
    %79 = vmatprep.subr.mxu0 0.0
    %80 = vmatpush1.msra.mxu0 0.0
    %81 = vmatprep.subr.mxu0 0.0
    %82 = vmatpush1.msra.mxu0 0.0
    %83 = vmatprep.subr.mxu0 0.0
    %84 = vmatpush1.msra.mxu0 0.0
    %85 = vmatprep.subr.mxu0 0.0
    %86 = vmatpush1.msra.mxu0 0.0
    %87 = vmatprep.subr.mxu0 0.0
    %88 = vmatpush1.msra.mxu0 0.0
    %89 = vmatprep.subr.mxu0 0.0
    %90 = vmatpush1.msra.mxu0 0.0
    %91 = vmatprep.subr.mxu0 0.0
    %92 = vmatpush1.msra.mxu0 0.0
    %93 = vmatprep.subr.mxu0 0.0
    %94 = vmatpush1.msra.mxu0 0.0
    %95 = vmatprep.subr.mxu0 0.0
    %96 = vmatpush1.msra.mxu0 0.0
    %97 = vmatprep.subr.mxu0 0.0
    %98 = vmatpush1.msra.mxu0 0.0
    %99 = vmatprep.subr.mxu0 0.0
    %100 = vmatpush1.msra.mxu0 0.0
    %101 = vmatprep.subr.mxu0 0.0
    %102 = vmatpush1.msra.mxu0 0.0
    %103 = vmatprep.subr.mxu0 0.0
    %104 = vmatpush1.msra.mxu0 0.0
    %105 = vmatprep.subr.mxu0 0.0
    %106 = vmatpush1.msra.mxu0 0.0
    %107 = vmatprep.subr.mxu0 0.0
    %108 = vmatpush1.msra.mxu0 0.0
    %109 = vmatprep.subr.mxu0 0.0
    %110 = vmatpush1.msra.mxu0 0.0
    %111 = vmatprep.subr.mxu0 0.0
    %112 = vmatpush1.msra.mxu0 0.0
    %113 = vmatprep.subr.mxu0 0.0
    %114 = vmatpush1.msra.mxu0 0.0
    %115 = vmatprep.subr.mxu0 0.0
    %116 = vmatpush1.msra.mxu0 0.0
    %117 = vmatprep.subr.mxu0 0.0
    %118 = vmatpush1.msra.mxu0 0.0
    %119 = vmatprep.subr.mxu0 0.0
    %120 = vmatpush1.msra.mxu0 0.0
    %121 = vmatprep.subr.mxu0 0.0
    %122 = vmatpush1.msra.mxu0 0.0
    %123 = vmatprep.subr.mxu0 0.0
    %124 = vmatpush1.msra.mxu0 0.0
    %125 = vmatprep.mubr.f32.mxu0 0.0
    %126 = vmatmul.mubr.f32.gmra.mrb[0].mxu0 %v51
    %v127 = vpop.f32.mrb[0].mxu0
    %v128 = vadd.f32 0.0, %v127
    %v129 = vpop.f32.mrb[0].mxu0
    %130 = vmatprep.mubr.f32.mxu0 0.0
    %131 = vmatmul.mubr.f32.gmra.mrb[0].mxu0 %v53
    %v132 = vpop.f32.mrb[0].mxu0
    %v133 = vadd.f32 0.0, %v132
    %v134 = vpop.f32.mrb[0].mxu0
    %135 = vmatprep.mubr.f32.mxu0 0.0
    %136 = vmatmul.mubr.f32.gmra.mrb[0].mxu0 %v55
    %v137 = vpop.f32.mrb[0].mxu0
    %v138 = vadd.f32 0.0, %v137
    %v139 = vpop.f32.mrb[0].mxu0
    %140 = vdwg.mxu0
    %v141 = vlaneseq
    %v142 = vshrl.u32 %v141, 7
    %v143 = vsub.s32 0, %v142
    %v144 = vrot.slane %v35, %v143
    %v145 = vadd.f32 %v144, %v128
    %v146 = vadd.f32 %v144, %v133
    %v147 = vadd.f32 %v144, %v138
    %v148 = vcombine.high %v37, %v37
    %v149 = vcombine.high %v39, %v39
    %vm150 = vcmask 1042432
    %vm151 = vcmask 1046532
    %vm152 = vmor %vm150, %vm151
    %v153 = vrot.slane %v36, 5
    %v154 = vrot.slane %v153, 4
    %v155 = vrot.slane %v44, 5
    %v156 = vsel %vm152, %v154, %v155
    %v157 = vrot.slane %v155, 4
    %v158 = vrot.slane %v37, 5
    %v159 = vsel %vm152, %v157, %v158
    %v160 = vrot.slane %v158, 4
    %v161 = vrot.slane %v148, 5
    %v162 = vsel %vm152, %v160, %v161
    %v163 = vrot.slane %v38, 5
    %v164 = vrot.slane %v163, 4
    %v165 = vrot.slane %v45, 5
    %v166 = vsel %vm152, %v164, %v165
    %v167 = vrot.slane %v165, 4
    %v168 = vrot.slane %v39, 5
    %v169 = vsel %vm152, %v167, %v168
    %v170 = vrot.slane %v168, 4
    %v171 = vrot.slane %v149, 5
    %v172 = vsel %vm152, %v170, %v171
    %s173 = scalar_lea.vmem %s1, 4
    %v174 = vld [vmem:[%s173] sm:$0xf]
    %v175 = vcombine.low %v156, %v159
    %v176 = vcombine.low %v162, %v166
    %v177 = vcombine.low %v169, %v172
    %v178 = vsel %vm50, %v175, 0
    %v180 = vsel %vm50, %v176, 0
    %v182 = vsel %vm50, %v177, 0
    %v185 = vsel %vm57, %v174, 0
    %187 = vmatprep.subr.mxu0 0.0
    %188 = vmatpush1.msra.mxu0 %v185
    %189 = vmatprep.subr.mxu0 0.0
    %190 = vmatpush1.msra.mxu0 0.0
    %191 = vmatprep.subr.mxu0 0.0
    %192 = vmatpush1.msra.mxu0 0.0
    %193 = vmatprep.subr.mxu0 0.0
    %194 = vmatpush1.msra.mxu0 0.0
    %195 = vmatprep.subr.mxu0 0.0
    %196 = vmatpush1.msra.mxu0 0.0
    %197 = vmatprep.subr.mxu0 0.0
    %198 = vmatpush1.msra.mxu0 0.0
    %199 = vmatprep.subr.mxu0 0.0
    %200 = vmatpush1.msra.mxu0 0.0
    %201 = vmatprep.subr.mxu0 0.0
    %202 = vmatpush1.msra.mxu0 0.0
    %203 = vmatprep.subr.mxu0 0.0
    %204 = vmatpush1.msra.mxu0 0.0
    %205 = vmatprep.subr.mxu0 0.0
    %206 = vmatpush1.msra.mxu0 0.0
    %207 = vmatprep.subr.mxu0 0.0
    %208 = vmatpush1.msra.mxu0 0.0
    %209 = vmatprep.subr.mxu0 0.0
    %210 = vmatpush1.msra.mxu0 0.0
    %211 = vmatprep.subr.mxu0 0.0
    %212 = vmatpush1.msra.mxu0 0.0
    %213 = vmatprep.subr.mxu0 0.0
    %214 = vmatpush1.msra.mxu0 0.0
    %215 = vmatprep.subr.mxu0 0.0
    %216 = vmatpush1.msra.mxu0 0.0
    %217 = vmatprep.subr.mxu0 0.0
    %218 = vmatpush1.msra.mxu0 0.0
    %219 = vmatprep.subr.mxu0 0.0
    %220 = vmatpush1.msra.mxu0 0.0
    %221 = vmatprep.subr.mxu0 0.0
    %222 = vmatpush1.msra.mxu0 0.0
    %223 = vmatprep.subr.mxu0 0.0
    %224 = vmatpush1.msra.mxu0 0.0
    %225 = vmatprep.subr.mxu0 0.0
    %226 = vmatpush1.msra.mxu0 0.0
    %227 = vmatprep.subr.mxu0 0.0
    %228 = vmatpush1.msra.mxu0 0.0
    %229 = vmatprep.subr.mxu0 0.0
    %230 = vmatpush1.msra.mxu0 0.0
    %231 = vmatprep.subr.mxu0 0.0
    %232 = vmatpush1.msra.mxu0 0.0
    %233 = vmatprep.subr.mxu0 0.0
    %234 = vmatpush1.msra.mxu0 0.0
    %235 = vmatprep.subr.mxu0 0.0
    %236 = vmatpush1.msra.mxu0 0.0
    %237 = vmatprep.subr.mxu0 0.0
    %238 = vmatpush1.msra.mxu0 0.0
    %239 = vmatprep.subr.mxu0 0.0
    %240 = vmatpush1.msra.mxu0 0.0
    %241 = vmatprep.subr.mxu0 0.0
    %242 = vmatpush1.msra.mxu0 0.0
    %243 = vmatprep.subr.mxu0 0.0
    %244 = vmatpush1.msra.mxu0 0.0
    %245 = vmatprep.subr.mxu0 0.0
    %246 = vmatpush1.msra.mxu0 0.0
    %247 = vmatprep.subr.mxu0 0.0
    %248 = vmatpush1.msra.mxu0 0.0
    %249 = vmatprep.subr.mxu0 0.0
    %250 = vmatpush1.msra.mxu0 0.0
    %251 = vmatprep.mubr.f32.mxu0 0.0
    %252 = vmatmul.mubr.f32.gmra.mrb[0].mxu0 %v178
    %v253 = vpop.f32.mrb[0].mxu0
    %v254 = vadd.f32 0.0, %v253
    %v255 = vpop.f32.mrb[0].mxu0
    %256 = vmatprep.mubr.f32.mxu0 0.0
    %257 = vmatmul.mubr.f32.gmra.mrb[0].mxu0 %v180
    %v258 = vpop.f32.mrb[0].mxu0
    %v259 = vadd.f32 0.0, %v258
    %v260 = vpop.f32.mrb[0].mxu0
    %261 = vmatprep.mubr.f32.mxu0 0.0
    %262 = vmatmul.mubr.f32.gmra.mrb[0].mxu0 %v182
    %v263 = vpop.f32.mrb[0].mxu0
    %v264 = vadd.f32 0.0, %v263
    %v265 = vpop.f32.mrb[0].mxu0
    %266 = vdwg.mxu0
    %v267 = vadd.f32 %v145, %v254
    %v268 = vadd.f32 %v146, %v259
    %v269 = vadd.f32 %v147, %v264
    %vm270 = vcmask 1041408
    %vm271 = vcmask 1045508
    %vm272 = vmor %vm270, %vm271
    %v273 = vrot.slane %v36, 6
    %v274 = vrot.slane %v273, 4
    %v275 = vrot.slane %v44, 6
    %v276 = vsel %vm272, %v274, %v275
    %v277 = vrot.slane %v275, 4
    %v278 = vrot.slane %v37, 6
    %v279 = vsel %vm272, %v277, %v278
    %v280 = vrot.slane %v278, 4
    %v281 = vrot.slane %v148, 6
    %v282 = vsel %vm272, %v280, %v281
    %v283 = vrot.slane %v38, 6
    %v284 = vrot.slane %v283, 4
    %v285 = vrot.slane %v45, 6
    %v286 = vsel %vm272, %v284, %v285
    %v287 = vrot.slane %v285, 4
    %v288 = vrot.slane %v39, 6
    %v289 = vsel %vm272, %v287, %v288
    %v290 = vrot.slane %v288, 4
    %v291 = vrot.slane %v149, 6
    %v292 = vsel %vm272, %v290, %v291
    %s293 = scalar_lea.vmem %s1, 8
    %v294 = vld [vmem:[%s293] sm:$0xf]
    %v295 = vcombine.low %v276, %v279
    %v296 = vcombine.low %v282, %v286
    %v297 = vcombine.low %v289, %v292
    %v298 = vsel %vm50, %v295, 0
    %v300 = vsel %vm50, %v296, 0
    %v302 = vsel %vm50, %v297, 0
    %v305 = vsel %vm57, %v294, 0
    %307 = vmatprep.subr.mxu0 0.0
    %308 = vmatpush1.msra.mxu0 %v305
    %309 = vmatprep.subr.mxu0 0.0
    %310 = vmatpush1.msra.mxu0 0.0
    %311 = vmatprep.subr.mxu0 0.0
    %312 = vmatpush1.msra.mxu0 0.0
    %313 = vmatprep.subr.mxu0 0.0
    %314 = vmatpush1.msra.mxu0 0.0
    %315 = vmatprep.subr.mxu0 0.0
    %316 = vmatpush1.msra.mxu0 0.0
    %317 = vmatprep.subr.mxu0 0.0
    %318 = vmatpush1.msra.mxu0 0.0
    %319 = vmatprep.subr.mxu0 0.0
    %320 = vmatpush1.msra.mxu0 0.0
    %321 = vmatprep.subr.mxu0 0.0
    %322 = vmatpush1.msra.mxu0 0.0
    %323 = vmatprep.subr.mxu0 0.0
    %324 = vmatpush1.msra.mxu0 0.0
    %325 = vmatprep.subr.mxu0 0.0
    %326 = vmatpush1.msra.mxu0 0.0
    %327 = vmatprep.subr.mxu0 0.0
    %328 = vmatpush1.msra.mxu0 0.0
    %329 = vmatprep.subr.mxu0 0.0
    %330 = vmatpush1.msra.mxu0 0.0
    %331 = vmatprep.subr.mxu0 0.0
    %332 = vmatpush1.msra.mxu0 0.0
    %333 = vmatprep.subr.mxu0 0.0
    %334 = vmatpush1.msra.mxu0 0.0
    %335 = vmatprep.subr.mxu0 0.0
    %336 = vmatpush1.msra.mxu0 0.0
    %337 = vmatprep.subr.mxu0 0.0
    %338 = vmatpush1.msra.mxu0 0.0
    %339 = vmatprep.subr.mxu0 0.0
    %340 = vmatpush1.msra.mxu0 0.0
    %341 = vmatprep.subr.mxu0 0.0
    %342 = vmatpush1.msra.mxu0 0.0
    %343 = vmatprep.subr.mxu0 0.0
    %344 = vmatpush1.msra.mxu0 0.0
    %345 = vmatprep.subr.mxu0 0.0
    %346 = vmatpush1.msra.mxu0 0.0
    %347 = vmatprep.subr.mxu0 0.0
    %348 = vmatpush1.msra.mxu0 0.0
    %349 = vmatprep.subr.mxu0 0.0
    %350 = vmatpush1.msra.mxu0 0.0
    %351 = vmatprep.subr.mxu0 0.0
    %352 = vmatpush1.msra.mxu0 0.0
    %353 = vmatprep.subr.mxu0 0.0
    %354 = vmatpush1.msra.mxu0 0.0
    %355 = vmatprep.subr.mxu0 0.0
    %356 = vmatpush1.msra.mxu0 0.0
    %357 = vmatprep.subr.mxu0 0.0
    %358 = vmatpush1.msra.mxu0 0.0
    %359 = vmatprep.subr.mxu0 0.0
    %360 = vmatpush1.msra.mxu0 0.0
    %361 = vmatprep.subr.mxu0 0.0
    %362 = vmatpush1.msra.mxu0 0.0
    %363 = vmatprep.subr.mxu0 0.0
    %364 = vmatpush1.msra.mxu0 0.0
    %365 = vmatprep.subr.mxu0 0.0
    %366 = vmatpush1.msra.mxu0 0.0
    %367 = vmatprep.subr.mxu0 0.0
    %368 = vmatpush1.msra.mxu0 0.0
    %369 = vmatprep.subr.mxu0 0.0
    %370 = vmatpush1.msra.mxu0 0.0
    %371 = vmatprep.mubr.f32.mxu0 0.0
    %372 = vmatmul.mubr.f32.gmra.mrb[0].mxu0 %v298
    %v373 = vpop.f32.mrb[0].mxu0
    %v374 = vadd.f32 0.0, %v373
    %v375 = vpop.f32.mrb[0].mxu0
    %376 = vmatprep.mubr.f32.mxu0 0.0
    %377 = vmatmul.mubr.f32.gmra.mrb[0].mxu0 %v300
    %v378 = vpop.f32.mrb[0].mxu0
    %v379 = vadd.f32 0.0, %v378
    %v380 = vpop.f32.mrb[0].mxu0
    %381 = vmatprep.mubr.f32.mxu0 0.0
    %382 = vmatmul.mubr.f32.gmra.mrb[0].mxu0 %v302
    %v383 = vpop.f32.mrb[0].mxu0
    %v384 = vadd.f32 0.0, %v383
    %v385 = vpop.f32.mrb[0].mxu0
    %386 = vdwg.mxu0
    %v387 = vadd.f32 %v267, %v374
    %v388 = vadd.f32 %v268, %v379
    %v389 = vadd.f32 %v269, %v384
    %vm390 = vcmask 1040384
    %vm391 = vcmask 1044484
    %vm392 = vmor %vm390, %vm391
    %v393 = vrot.slane %v36, 7
    %v394 = vrot.slane %v393, 4
    %v395 = vrot.slane %v44, 7
    %v396 = vsel %vm392, %v394, %v395
    %v397 = vrot.slane %v395, 4
    %v398 = vrot.slane %v37, 7
    %v399 = vsel %vm392, %v397, %v398
    %v400 = vrot.slane %v398, 4
    %v401 = vrot.slane %v148, 7
    %v402 = vsel %vm392, %v400, %v401
    %v403 = vrot.slane %v38, 7
    %v404 = vrot.slane %v403, 4
    %v405 = vrot.slane %v45, 7
    %v406 = vsel %vm392, %v404, %v405
    %v407 = vrot.slane %v405, 4
    %v408 = vrot.slane %v39, 7
    %v409 = vsel %vm392, %v407, %v408
    %v410 = vrot.slane %v408, 4
    %v411 = vrot.slane %v149, 7
    %v412 = vsel %vm392, %v410, %v411
    %s413 = scalar_lea.vmem %s1, 12
    %v414 = vld [vmem:[%s413] sm:$0xf]
    %v415 = vcombine.low %v396, %v399
    %v416 = vcombine.low %v402, %v406
    %v417 = vcombine.low %v409, %v412
    %v418 = vsel %vm50, %v415, 0
    %v420 = vsel %vm50, %v416, 0
    %v422 = vsel %vm50, %v417, 0
    %v425 = vsel %vm57, %v414, 0
    %427 = vmatprep.subr.mxu0 0.0
    %428 = vmatpush1.msra.mxu0 %v425
    %429 = vmatprep.subr.mxu0 0.0
    %430 = vmatpush1.msra.mxu0 0.0
    %431 = vmatprep.subr.mxu0 0.0
    %432 = vmatpush1.msra.mxu0 0.0
    %433 = vmatprep.subr.mxu0 0.0
    %434 = vmatpush1.msra.mxu0 0.0
    %435 = vmatprep.subr.mxu0 0.0
    %436 = vmatpush1.msra.mxu0 0.0
    %437 = vmatprep.subr.mxu0 0.0
    %438 = vmatpush1.msra.mxu0 0.0
    %439 = vmatprep.subr.mxu0 0.0
    %440 = vmatpush1.msra.mxu0 0.0
    %441 = vmatprep.subr.mxu0 0.0
    %442 = vmatpush1.msra.mxu0 0.0
    %443 = vmatprep.subr.mxu0 0.0
    %444 = vmatpush1.msra.mxu0 0.0
    %445 = vmatprep.subr.mxu0 0.0
    %446 = vmatpush1.msra.mxu0 0.0
    %447 = vmatprep.subr.mxu0 0.0
    %448 = vmatpush1.msra.mxu0 0.0
    %449 = vmatprep.subr.mxu0 0.0
    %450 = vmatpush1.msra.mxu0 0.0
    %451 = vmatprep.subr.mxu0 0.0
    %452 = vmatpush1.msra.mxu0 0.0
    %453 = vmatprep.subr.mxu0 0.0
    %454 = vmatpush1.msra.mxu0 0.0
    %455 = vmatprep.subr.mxu0 0.0
    %456 = vmatpush1.msra.mxu0 0.0
    %457 = vmatprep.subr.mxu0 0.0
    %458 = vmatpush1.msra.mxu0 0.0
    %459 = vmatprep.subr.mxu0 0.0
    %460 = vmatpush1.msra.mxu0 0.0
    %461 = vmatprep.subr.mxu0 0.0
    %462 = vmatpush1.msra.mxu0 0.0
    %463 = vmatprep.subr.mxu0 0.0
    %464 = vmatpush1.msra.mxu0 0.0
    %465 = vmatprep.subr.mxu0 0.0
    %466 = vmatpush1.msra.mxu0 0.0
    %467 = vmatprep.subr.mxu0 0.0
    %468 = vmatpush1.msra.mxu0 0.0
    %469 = vmatprep.subr.mxu0 0.0
    %470 = vmatpush1.msra.mxu0 0.0
    %471 = vmatprep.subr.mxu0 0.0
    %472 = vmatpush1.msra.mxu0 0.0
    %473 = vmatprep.subr.mxu0 0.0
    %474 = vmatpush1.msra.mxu0 0.0
    %475 = vmatprep.subr.mxu0 0.0
    %476 = vmatpush1.msra.mxu0 0.0
    %477 = vmatprep.subr.mxu0 0.0
    %478 = vmatpush1.msra.mxu0 0.0
    %479 = vmatprep.subr.mxu0 0.0
    %480 = vmatpush1.msra.mxu0 0.0
    %481 = vmatprep.subr.mxu0 0.0
    %482 = vmatpush1.msra.mxu0 0.0
    %483 = vmatprep.subr.mxu0 0.0
    %484 = vmatpush1.msra.mxu0 0.0
    %485 = vmatprep.subr.mxu0 0.0
    %486 = vmatpush1.msra.mxu0 0.0
    %487 = vmatprep.subr.mxu0 0.0
    %488 = vmatpush1.msra.mxu0 0.0
    %489 = vmatprep.subr.mxu0 0.0
    %490 = vmatpush1.msra.mxu0 0.0
    %491 = vmatprep.mubr.f32.mxu0 0.0
    %492 = vmatmul.mubr.f32.gmra.mrb[0].mxu0 %v418
    %v493 = vpop.f32.mrb[0].mxu0
    %v494 = vadd.f32 0.0, %v493
    %v495 = vpop.f32.mrb[0].mxu0
    %496 = vmatprep.mubr.f32.mxu0 0.0
    %497 = vmatmul.mubr.f32.gmra.mrb[0].mxu0 %v420
    %v498 = vpop.f32.mrb[0].mxu0
    %v499 = vadd.f32 0.0, %v498
    %v500 = vpop.f32.mrb[0].mxu0
    %501 = vmatprep.mubr.f32.mxu0 0.0
    %502 = vmatmul.mubr.f32.gmra.mrb[0].mxu0 %v422
    %v503 = vpop.f32.mrb[0].mxu0
    %v504 = vadd.f32 0.0, %v503
    %v505 = vpop.f32.mrb[0].mxu0
    %506 = vdwg.mxu0
    %v507 = vadd.f32 %v387, %v494
    %v508 = vadd.f32 %v388, %v499
    %v509 = vadd.f32 %v389, %v504
    %s510 = scalar_lea.vmem %s1, 16
    %v511 = vld [vmem:[%s510] sm:$0xf]
    %v512 = vcombine.low %v44, %v37
    %v513 = vcombine.low %v148, %v45
    %v514 = vcombine.low %v39, %v149
    %v515 = vsel %vm50, %v512, 0
    %v517 = vsel %vm50, %v513, 0
    %v519 = vsel %vm50, %v514, 0
    %v522 = vsel %vm57, %v511, 0
    %524 = vmatprep.subr.mxu0 0.0
    %525 = vmatpush1.msra.mxu0 %v522
    %526 = vmatprep.subr.mxu0 0.0
    %527 = vmatpush1.msra.mxu0 0.0
    %528 = vmatprep.subr.mxu0 0.0
    %529 = vmatpush1.msra.mxu0 0.0
    %530 = vmatprep.subr.mxu0 0.0
    %531 = vmatpush1.msra.mxu0 0.0
    %532 = vmatprep.subr.mxu0 0.0
    %533 = vmatpush1.msra.mxu0 0.0
    %534 = vmatprep.subr.mxu0 0.0
    %535 = vmatpush1.msra.mxu0 0.0
    %536 = vmatprep.subr.mxu0 0.0
    %537 = vmatpush1.msra.mxu0 0.0
    %538 = vmatprep.subr.mxu0 0.0
    %539 = vmatpush1.msra.mxu0 0.0
    %540 = vmatprep.subr.mxu0 0.0
    %541 = vmatpush1.msra.mxu0 0.0
    %542 = vmatprep.subr.mxu0 0.0
    %543 = vmatpush1.msra.mxu0 0.0
    %544 = vmatprep.subr.mxu0 0.0
    %545 = vmatpush1.msra.mxu0 0.0
    %546 = vmatprep.subr.mxu0 0.0
    %547 = vmatpush1.msra.mxu0 0.0
    %548 = vmatprep.subr.mxu0 0.0
    %549 = vmatpush1.msra.mxu0 0.0
    %550 = vmatprep.subr.mxu0 0.0
    %551 = vmatpush1.msra.mxu0 0.0
    %552 = vmatprep.subr.mxu0 0.0
    %553 = vmatpush1.msra.mxu0 0.0
    %554 = vmatprep.subr.mxu0 0.0
    %555 = vmatpush1.msra.mxu0 0.0
    %556 = vmatprep.subr.mxu0 0.0
    %557 = vmatpush1.msra.mxu0 0.0
    %558 = vmatprep.subr.mxu0 0.0
    %559 = vmatpush1.msra.mxu0 0.0
    %560 = vmatprep.subr.mxu0 0.0
    %561 = vmatpush1.msra.mxu0 0.0
    %562 = vmatprep.subr.mxu0 0.0
    %563 = vmatpush1.msra.mxu0 0.0
    %564 = vmatprep.subr.mxu0 0.0
    %565 = vmatpush1.msra.mxu0 0.0
    %566 = vmatprep.subr.mxu0 0.0
    %567 = vmatpush1.msra.mxu0 0.0
    %568 = vmatprep.subr.mxu0 0.0
    %569 = vmatpush1.msra.mxu0 0.0
    %570 = vmatprep.subr.mxu0 0.0
    %571 = vmatpush1.msra.mxu0 0.0
    %572 = vmatprep.subr.mxu0 0.0
    %573 = vmatpush1.msra.mxu0 0.0
    %574 = vmatprep.subr.mxu0 0.0
    %575 = vmatpush1.msra.mxu0 0.0
    %576 = vmatprep.subr.mxu0 0.0
    %577 = vmatpush1.msra.mxu0 0.0
    %578 = vmatprep.subr.mxu0 0.0
    %579 = vmatpush1.msra.mxu0 0.0
    %580 = vmatprep.subr.mxu0 0.0
    %581 = vmatpush1.msra.mxu0 0.0
    %582 = vmatprep.subr.mxu0 0.0
    %583 = vmatpush1.msra.mxu0 0.0
    %584 = vmatprep.subr.mxu0 0.0
    %585 = vmatpush1.msra.mxu0 0.0
    %586 = vmatprep.subr.mxu0 0.0
    %587 = vmatpush1.msra.mxu0 0.0
    %588 = vmatprep.mubr.f32.mxu0 0.0
    %589 = vmatmul.mubr.f32.gmra.mrb[0].mxu0 %v515
    %v590 = vpop.f32.mrb[0].mxu0
    %v591 = vadd.f32 0.0, %v590
    %v592 = vpop.f32.mrb[0].mxu0
    %593 = vmatprep.mubr.f32.mxu0 0.0
    %594 = vmatmul.mubr.f32.gmra.mrb[0].mxu0 %v517
    %v595 = vpop.f32.mrb[0].mxu0
    %v596 = vadd.f32 0.0, %v595
    %v597 = vpop.f32.mrb[0].mxu0
    %598 = vmatprep.mubr.f32.mxu0 0.0
    %599 = vmatmul.mubr.f32.gmra.mrb[0].mxu0 %v519
    %v600 = vpop.f32.mrb[0].mxu0
    %v601 = vadd.f32 0.0, %v600
    %v602 = vpop.f32.mrb[0].mxu0
    %603 = vdwg.mxu0
    %v604 = vadd.f32 %v507, %v591
    %v605 = vadd.f32 %v508, %v596
    %v606 = vadd.f32 %v509, %v601
    %v607 = vmax.f32 %v604, 0.0
    %v608 = vmax.f32 %v605, 0.0
    %v609 = vmax.f32 %v606, 0.0
    %vm610 = vcmask 261120
    %v611 = vsel %vm610, %v607, 0.0
    %v612 = vsel %vm610, %v608, 0.0
    %v613 = vadd.f32 %v611, %v612
    %v614 = vsel %vm610, %v609, 0.0
    %v615 = vadd.f32 %v613, %v614
    %v616 = vrot.slane %v615, 4
    %v617 = vadd.f32 %v615, %v616
    %v618 = vrot.slane %v617, 2
    %v619 = vadd.f32 %v617, %v618
    %v620 = vrot.slane %v619, 1
    %v621 = vadd.f32 %v619, %v620
    %v622 = vmul.f32 %v621, 0.041666668
    %v623 = vsub.f32 %v607, %v622
    %v624 = vsub.f32 %v608, %v622
    %v625 = vsub.f32 %v609, %v622
    %v626 = vmul.f32 %v623, %v623
    %v627 = vmul.f32 %v624, %v624
    %v628 = vmul.f32 %v625, %v625
    %v629 = vsel %vm610, %v626, 0.0
    %v630 = vsel %vm610, %v627, 0.0
    %v631 = vadd.f32 %v629, %v630
    %v632 = vsel %vm610, %v628, 0.0
    %v633 = vadd.f32 %v631, %v632
    %v634 = vrot.slane %v633, 4
    %v635 = vadd.f32 %v633, %v634
    %v636 = vrot.slane %v635, 2
    %v637 = vadd.f32 %v635, %v636
    %v638 = vrot.slane %v637, 1
    %v639 = vadd.f32 %v637, %v638
    %v640 = vmul.f32 %v639, 0.041666668
    %v641 = vadd.f32 %v640, 1e-05
    %v642 = vrsqrt.pop %v641
    %v643 = vmul.f32 %v35, %v642
    %v644 = vlaneseq
    %v645 = vshrl.u32 %v644, 7
    %v646 = vsub.s32 1, %v645
    %v647 = vrot.slane %v643, %v646
    %v648 = vmul.f32 %v623, %v647
    %v649 = vmul.f32 %v624, %v647
    %v650 = vmul.f32 %v625, %v647
    %v651 = vlaneseq
    %v652 = vshrl.u32 %v651, 7
    %v653 = vsub.s32 2, %v652
    %v654 = vrot.slane %v35, %v653
    %v655 = vadd.f32 %v648, %v654
    %v656 = vadd.f32 %v649, %v654
    %v657 = vadd.f32 %v650, %v654
    %v661 = vcombine.high %v655, %v655
    %v663 = vunpack.c.l.s4 1983009808
    %v664 = vunpack.c.0.s8 %v663
    %v665 = vlaneseq
    %v666 = vshrl.u32 %v665, 7
    %v667 = vsub.s32 %v664, %v666
    %v668 = vrot.slane %v655, %v667
    %v670 = vunpack.c.l.s4 1983009808
    %v671 = vunpack.c.0.s8 %v670
    %v672 = vlaneseq
    %v673 = vshrl.u32 %v672, 7
    %v674 = vsub.s32 %v671, %v673
    %v675 = vrot.slane %v661, %v674
    %v676 = vcombine.high %v668, %v668
    %v677 = vcombine.high %v675, %v675
    %v678 = vcombine.high %v656, %v656
    %v680 = vunpack.c.l.s4 1983009808
    %v681 = vunpack.c.0.s8 %v680
    %v682 = vlaneseq
    %v683 = vshrl.u32 %v682, 7
    %v684 = vsub.s32 %v681, %v683
    %v685 = vrot.slane %v656, %v684
    %v687 = vunpack.c.l.s4 1983009808
    %v688 = vunpack.c.0.s8 %v687
    %v689 = vlaneseq
    %v690 = vshrl.u32 %v689, 7
    %v691 = vsub.s32 %v688, %v690
    %v692 = vrot.slane %v678, %v691
    %v693 = vcombine.high %v685, %v685
    %v694 = vcombine.high %v692, %v692
    %v695 = vcombine.high %v657, %v657
    %v697 = vunpack.c.l.s4 1983009808
    %v698 = vunpack.c.0.s8 %v697
    %v699 = vlaneseq
    %v700 = vshrl.u32 %v699, 7
    %v701 = vsub.s32 %v698, %v700
    %v702 = vrot.slane %v657, %v701
    %v704 = vunpack.c.l.s4 1983009808
    %v705 = vunpack.c.0.s8 %v704
    %v706 = vlaneseq
    %v707 = vshrl.u32 %v706, 7
    %v708 = vsub.s32 %v705, %v707
    %v709 = vrot.slane %v695, %v708
    %v710 = vcombine.high %v702, %v702
    %v711 = vcombine.high %v709, %v709
    %vm724 = vcmask 254976
    %v725 = vsel %vm724, %v668, -inf
    %v726 = vrot.slane %v725, 4
    %v727 = vmax.f32 %v725, %v726
    %v728 = vrot.slane %v727, 2
    %v729 = vmax.f32 %v727, %v728
    %v730 = vrot.slane %v729, 1
    %v731 = vmax.f32 %v729, %v730
    %v732 = vsel %vm724, %v676, -inf
    %v733 = vrot.slane %v732, 4
    %v734 = vmax.f32 %v732, %v733
    %v735 = vrot.slane %v734, 2
    %v736 = vmax.f32 %v734, %v735
    %v737 = vrot.slane %v736, 1
    %v738 = vmax.f32 %v736, %v737
    %v739 = vsel %vm724, %v675, -inf
    %v740 = vrot.slane %v739, 4
    %v741 = vmax.f32 %v739, %v740
    %v742 = vrot.slane %v741, 2
    %v743 = vmax.f32 %v741, %v742
    %v744 = vrot.slane %v743, 1
    %v745 = vmax.f32 %v743, %v744
    %v746 = vsel %vm724, %v677, -inf
    %v747 = vrot.slane %v746, 4
    %v748 = vmax.f32 %v746, %v747
    %v749 = vrot.slane %v748, 2
    %v750 = vmax.f32 %v748, %v749
    %v751 = vrot.slane %v750, 1
    %v752 = vmax.f32 %v750, %v751
    %v753 = vsel %vm724, %v685, -inf
    %v754 = vrot.slane %v753, 4
    %v755 = vmax.f32 %v753, %v754
    %v756 = vrot.slane %v755, 2
    %v757 = vmax.f32 %v755, %v756
    %v758 = vrot.slane %v757, 1
    %v759 = vmax.f32 %v757, %v758
    %v760 = vsel %vm724, %v693, -inf
    %v761 = vrot.slane %v760, 4
    %v762 = vmax.f32 %v760, %v761
    %v763 = vrot.slane %v762, 2
    %v764 = vmax.f32 %v762, %v763
    %v765 = vrot.slane %v764, 1
    %v766 = vmax.f32 %v764, %v765
    %v767 = vsel %vm724, %v692, -inf
    %v768 = vrot.slane %v767, 4
    %v769 = vmax.f32 %v767, %v768
    %v770 = vrot.slane %v769, 2
    %v771 = vmax.f32 %v769, %v770
    %v772 = vrot.slane %v771, 1
    %v773 = vmax.f32 %v771, %v772
    %v774 = vsel %vm724, %v694, -inf
    %v775 = vrot.slane %v774, 4
    %v776 = vmax.f32 %v774, %v775
    %v777 = vrot.slane %v776, 2
    %v778 = vmax.f32 %v776, %v777
    %v779 = vrot.slane %v778, 1
    %v780 = vmax.f32 %v778, %v779
    %v781 = vsel %vm724, %v702, -inf
    %v782 = vrot.slane %v781, 4
    %v783 = vmax.f32 %v781, %v782
    %v784 = vrot.slane %v783, 2
    %v785 = vmax.f32 %v783, %v784
    %v786 = vrot.slane %v785, 1
    %v787 = vmax.f32 %v785, %v786
    %v788 = vsel %vm724, %v710, -inf
    %v789 = vrot.slane %v788, 4
    %v790 = vmax.f32 %v788, %v789
    %v791 = vrot.slane %v790, 2
    %v792 = vmax.f32 %v790, %v791
    %v793 = vrot.slane %v792, 1
    %v794 = vmax.f32 %v792, %v793
    %v795 = vsel %vm724, %v709, -inf
    %v796 = vrot.slane %v795, 4
    %v797 = vmax.f32 %v795, %v796
    %v798 = vrot.slane %v797, 2
    %v799 = vmax.f32 %v797, %v798
    %v800 = vrot.slane %v799, 1
    %v801 = vmax.f32 %v799, %v800
    %v802 = vsel %vm724, %v711, -inf
    %v803 = vrot.slane %v802, 4
    %v804 = vmax.f32 %v802, %v803
    %v805 = vrot.slane %v804, 2
    %v806 = vmax.f32 %v804, %v805
    %v807 = vrot.slane %v806, 1
    %v808 = vmax.f32 %v806, %v807
    %v809 = vld [vmem:[#allocation2] sm:$0xff]
    %v810 = vld [vmem:[#allocation2 + $0x8] sm:$0xff]
    %v811 = vld [vmem:[#allocation2 + $0x10] sm:$0xff]
    %v812 = vld [vmem:[#allocation2 + $0x18] sm:$0xff]
    %vm817 = vcmask 1041409
    %v818 = vsel %vm817, %v738, %v731
    %vm819 = vcmask 1042434
    %v820 = vsel %vm819, %v773, %v818
    %vm821 = vcmask 1043459
    %v822 = vsel %vm821, %v780, %v820
    %v823 = vsel %vm610, %v822, 0
    %825 = vmatprep.subr.mxu0 0.0
    %826 = vmatpush1.msra.mxu0 %v809
    %827 = vmatprep.subr.mxu0 0.0
    %828 = vmatpush1.msra.mxu0 %v810
    %829 = vmatprep.subr.mxu0 0.0
    %830 = vmatpush1.msra.mxu0 %v811
    %831 = vmatprep.subr.mxu0 0.0
    %832 = vmatpush1.msra.mxu0 %v812
    %833 = vmatprep.subr.mxu0 0.0
    %834 = vmatpush1.msra.mxu0 0.0
    %835 = vmatprep.subr.mxu0 0.0
    %836 = vmatpush1.msra.mxu0 0.0
    %837 = vmatprep.subr.mxu0 0.0
    %838 = vmatpush1.msra.mxu0 0.0
    %839 = vmatprep.subr.mxu0 0.0
    %840 = vmatpush1.msra.mxu0 0.0
    %841 = vmatprep.subr.mxu0 0.0
    %842 = vmatpush1.msra.mxu0 0.0
    %843 = vmatprep.subr.mxu0 0.0
    %844 = vmatpush1.msra.mxu0 0.0
    %845 = vmatprep.subr.mxu0 0.0
    %846 = vmatpush1.msra.mxu0 0.0
    %847 = vmatprep.subr.mxu0 0.0
    %848 = vmatpush1.msra.mxu0 0.0
    %849 = vmatprep.subr.mxu0 0.0
    %850 = vmatpush1.msra.mxu0 0.0
    %851 = vmatprep.subr.mxu0 0.0
    %852 = vmatpush1.msra.mxu0 0.0
    %853 = vmatprep.subr.mxu0 0.0
    %854 = vmatpush1.msra.mxu0 0.0
    %855 = vmatprep.subr.mxu0 0.0
    %856 = vmatpush1.msra.mxu0 0.0
    %857 = vmatprep.subr.mxu0 0.0
    %858 = vmatpush1.msra.mxu0 0.0
    %859 = vmatprep.subr.mxu0 0.0
    %860 = vmatpush1.msra.mxu0 0.0
    %861 = vmatprep.subr.mxu0 0.0
    %862 = vmatpush1.msra.mxu0 0.0
    %863 = vmatprep.subr.mxu0 0.0
    %864 = vmatpush1.msra.mxu0 0.0
    %865 = vmatprep.subr.mxu0 0.0
    %866 = vmatpush1.msra.mxu0 0.0
    %867 = vmatprep.subr.mxu0 0.0
    %868 = vmatpush1.msra.mxu0 0.0
    %869 = vmatprep.subr.mxu0 0.0
    %870 = vmatpush1.msra.mxu0 0.0
    %871 = vmatprep.subr.mxu0 0.0
    %872 = vmatpush1.msra.mxu0 0.0
    %873 = vmatprep.subr.mxu0 0.0
    %874 = vmatpush1.msra.mxu0 0.0
    %875 = vmatprep.subr.mxu0 0.0
    %876 = vmatpush1.msra.mxu0 0.0
    %877 = vmatprep.subr.mxu0 0.0
    %878 = vmatpush1.msra.mxu0 0.0
    %879 = vmatprep.subr.mxu0 0.0
    %880 = vmatpush1.msra.mxu0 0.0
    %881 = vmatprep.subr.mxu0 0.0
    %882 = vmatpush1.msra.mxu0 0.0
    %883 = vmatprep.subr.mxu0 0.0
    %884 = vmatpush1.msra.mxu0 0.0
    %885 = vmatprep.subr.mxu0 0.0
    %886 = vmatpush1.msra.mxu0 0.0
    %887 = vmatprep.subr.mxu0 0.0
    %888 = vmatpush1.msra.mxu0 0.0
    %889 = vmatprep.mubr.f32.mxu0 0.0
    %890 = vmatmul.mubr.f32.gmra.mrb[0].mxu0 %v823
    %v891 = vpop.f32.mrb[0].mxu0
    %v892 = vadd.f32 0.0, %v891
    %v893 = vpop.f32.mrb[0].mxu0
    %894 = vdwg.mxu0
    %v895 = vlaneseq
    %v896 = vshrl.u32 %v895, 7
    %v897 = vsub.s32 3, %v896
    %v898 = vrot.slane %v35, %v897
    %v899 = vadd.f32 %v898, %v892
    %s900 = scalar_lea.vmem [#allocation2], 32
    %v901 = vld [vmem:[%s900] sm:$0xff]
    %v902 = vld [vmem:[%s900 + $0x8] sm:$0xff]
    %v903 = vld [vmem:[%s900 + $0x10] sm:$0xff]
    %v904 = vld [vmem:[%s900 + $0x18] sm:$0xff]
    %v907 = vsel %vm817, %v745, %v738
    %v908 = vsel %vm819, %v780, %v907
    %v909 = vsel %vm821, %v787, %v908
    %v910 = vsel %vm610, %v909, 0
    %912 = vmatprep.subr.mxu0 0.0
    %913 = vmatpush1.msra.mxu0 %v901
    %914 = vmatprep.subr.mxu0 0.0
    %915 = vmatpush1.msra.mxu0 %v902
    %916 = vmatprep.subr.mxu0 0.0
    %917 = vmatpush1.msra.mxu0 %v903
    %918 = vmatprep.subr.mxu0 0.0
    %919 = vmatpush1.msra.mxu0 %v904
    %920 = vmatprep.subr.mxu0 0.0
    %921 = vmatpush1.msra.mxu0 0.0
    %922 = vmatprep.subr.mxu0 0.0
    %923 = vmatpush1.msra.mxu0 0.0
    %924 = vmatprep.subr.mxu0 0.0
    %925 = vmatpush1.msra.mxu0 0.0
    %926 = vmatprep.subr.mxu0 0.0
    %927 = vmatpush1.msra.mxu0 0.0
    %928 = vmatprep.subr.mxu0 0.0
    %929 = vmatpush1.msra.mxu0 0.0
    %930 = vmatprep.subr.mxu0 0.0
    %931 = vmatpush1.msra.mxu0 0.0
    %932 = vmatprep.subr.mxu0 0.0
    %933 = vmatpush1.msra.mxu0 0.0
    %934 = vmatprep.subr.mxu0 0.0
    %935 = vmatpush1.msra.mxu0 0.0
    %936 = vmatprep.subr.mxu0 0.0
    %937 = vmatpush1.msra.mxu0 0.0
    %938 = vmatprep.subr.mxu0 0.0
    %939 = vmatpush1.msra.mxu0 0.0
    %940 = vmatprep.subr.mxu0 0.0
    %941 = vmatpush1.msra.mxu0 0.0
    %942 = vmatprep.subr.mxu0 0.0
    %943 = vmatpush1.msra.mxu0 0.0
    %944 = vmatprep.subr.mxu0 0.0
    %945 = vmatpush1.msra.mxu0 0.0
    %946 = vmatprep.subr.mxu0 0.0
    %947 = vmatpush1.msra.mxu0 0.0
    %948 = vmatprep.subr.mxu0 0.0
    %949 = vmatpush1.msra.mxu0 0.0
    %950 = vmatprep.subr.mxu0 0.0
    %951 = vmatpush1.msra.mxu0 0.0
    %952 = vmatprep.subr.mxu0 0.0
    %953 = vmatpush1.msra.mxu0 0.0
    %954 = vmatprep.subr.mxu0 0.0
    %955 = vmatpush1.msra.mxu0 0.0
    %956 = vmatprep.subr.mxu0 0.0
    %957 = vmatpush1.msra.mxu0 0.0
    %958 = vmatprep.subr.mxu0 0.0
    %959 = vmatpush1.msra.mxu0 0.0
    %960 = vmatprep.subr.mxu0 0.0
    %961 = vmatpush1.msra.mxu0 0.0
    %962 = vmatprep.subr.mxu0 0.0
    %963 = vmatpush1.msra.mxu0 0.0
    %964 = vmatprep.subr.mxu0 0.0
    %965 = vmatpush1.msra.mxu0 0.0
    %966 = vmatprep.subr.mxu0 0.0
    %967 = vmatpush1.msra.mxu0 0.0
    %968 = vmatprep.subr.mxu0 0.0
    %969 = vmatpush1.msra.mxu0 0.0
    %970 = vmatprep.subr.mxu0 0.0
    %971 = vmatpush1.msra.mxu0 0.0
    %972 = vmatprep.subr.mxu0 0.0
    %973 = vmatpush1.msra.mxu0 0.0
    %974 = vmatprep.subr.mxu0 0.0
    %975 = vmatpush1.msra.mxu0 0.0
    %976 = vmatprep.mubr.f32.mxu0 0.0
    %977 = vmatmul.mubr.f32.gmra.mrb[0].mxu0 %v910
    %v978 = vpop.f32.mrb[0].mxu0
    %v979 = vadd.f32 0.0, %v978
    %v980 = vpop.f32.mrb[0].mxu0
    %981 = vdwg.mxu0
    %v982 = vadd.f32 %v899, %v979
    %s983 = scalar_lea.vmem [#allocation2], 64
    %v984 = vld [vmem:[%s983] sm:$0xff]
    %v985 = vld [vmem:[%s983 + $0x8] sm:$0xff]
    %v986 = vld [vmem:[%s983 + $0x10] sm:$0xff]
    %v987 = vld [vmem:[%s983 + $0x18] sm:$0xff]
    %v990 = vsel %vm817, %v752, %v745
    %v991 = vsel %vm819, %v787, %v990
    %v992 = vsel %vm821, %v794, %v991
    %v993 = vsel %vm610, %v992, 0
    %995 = vmatprep.subr.mxu0 0.0
    %996 = vmatpush1.msra.mxu0 %v984
    %997 = vmatprep.subr.mxu0 0.0
    %998 = vmatpush1.msra.mxu0 %v985
    %999 = vmatprep.subr.mxu0 0.0
    %1000 = vmatpush1.msra.mxu0 %v986
    %1001 = vmatprep.subr.mxu0 0.0
    %1002 = vmatpush1.msra.mxu0 %v987
    %1003 = vmatprep.subr.mxu0 0.0
    %1004 = vmatpush1.msra.mxu0 0.0
    %1005 = vmatprep.subr.mxu0 0.0
    %1006 = vmatpush1.msra.mxu0 0.0
    %1007 = vmatprep.subr.mxu0 0.0
    %1008 = vmatpush1.msra.mxu0 0.0
    %1009 = vmatprep.subr.mxu0 0.0
    %1010 = vmatpush1.msra.mxu0 0.0
    %1011 = vmatprep.subr.mxu0 0.0
    %1012 = vmatpush1.msra.mxu0 0.0
    %1013 = vmatprep.subr.mxu0 0.0
    %1014 = vmatpush1.msra.mxu0 0.0
    %1015 = vmatprep.subr.mxu0 0.0
    %1016 = vmatpush1.msra.mxu0 0.0
    %1017 = vmatprep.subr.mxu0 0.0
    %1018 = vmatpush1.msra.mxu0 0.0
    %1019 = vmatprep.subr.mxu0 0.0
    %1020 = vmatpush1.msra.mxu0 0.0
    %1021 = vmatprep.subr.mxu0 0.0
    %1022 = vmatpush1.msra.mxu0 0.0
    %1023 = vmatprep.subr.mxu0 0.0
    %1024 = vmatpush1.msra.mxu0 0.0
    %1025 = vmatprep.subr.mxu0 0.0
    %1026 = vmatpush1.msra.mxu0 0.0
    %1027 = vmatprep.subr.mxu0 0.0
    %1028 = vmatpush1.msra.mxu0 0.0
    %1029 = vmatprep.subr.mxu0 0.0
    %1030 = vmatpush1.msra.mxu0 0.0
    %1031 = vmatprep.subr.mxu0 0.0
    %1032 = vmatpush1.msra.mxu0 0.0
    %1033 = vmatprep.subr.mxu0 0.0
    %1034 = vmatpush1.msra.mxu0 0.0
    %1035 = vmatprep.subr.mxu0 0.0
    %1036 = vmatpush1.msra.mxu0 0.0
    %1037 = vmatprep.subr.mxu0 0.0
    %1038 = vmatpush1.msra.mxu0 0.0
    %1039 = vmatprep.subr.mxu0 0.0
    %1040 = vmatpush1.msra.mxu0 0.0
    %1041 = vmatprep.subr.mxu0 0.0
    %1042 = vmatpush1.msra.mxu0 0.0
    %1043 = vmatprep.subr.mxu0 0.0
    %1044 = vmatpush1.msra.mxu0 0.0
    %1045 = vmatprep.subr.mxu0 0.0
    %1046 = vmatpush1.msra.mxu0 0.0
    %1047 = vmatprep.subr.mxu0 0.0
    %1048 = vmatpush1.msra.mxu0 0.0
    %1049 = vmatprep.subr.mxu0 0.0
    %1050 = vmatpush1.msra.mxu0 0.0
    %1051 = vmatprep.subr.mxu0 0.0
    %1052 = vmatpush1.msra.mxu0 0.0
    %1053 = vmatprep.subr.mxu0 0.0
    %1054 = vmatpush1.msra.mxu0 0.0
    %1055 = vmatprep.subr.mxu0 0.0
    %1056 = vmatpush1.msra.mxu0 0.0
    %1057 = vmatprep.subr.mxu0 0.0
    %1058 = vmatpush1.msra.mxu0 0.0
    %1059 = vmatprep.mubr.f32.mxu0 0.0
    %1060 = vmatmul.mubr.f32.gmra.mrb[0].mxu0 %v993
    %v1061 = vpop.f32.mrb[0].mxu0
    %v1062 = vadd.f32 0.0, %v1061
    %v1063 = vpop.f32.mrb[0].mxu0
    %1064 = vdwg.mxu0
    %v1065 = vadd.f32 %v982, %v1062
    %s1066 = scalar_lea.vmem [#allocation2], 96
    %v1067 = vld [vmem:[%s1066] sm:$0xff]
    %v1068 = vld [vmem:[%s1066 + $0x8] sm:$0xff]
    %v1069 = vld [vmem:[%s1066 + $0x10] sm:$0xff]
    %v1070 = vld [vmem:[%s1066 + $0x18] sm:$0xff]
    %v1073 = vsel %vm817, %v759, %v752
    %v1074 = vsel %vm819, %v794, %v1073
    %v1075 = vsel %vm821, %v801, %v1074
    %v1076 = vsel %vm610, %v1075, 0
    %1078 = vmatprep.subr.mxu0 0.0
    %1079 = vmatpush1.msra.mxu0 %v1067
    %1080 = vmatprep.subr.mxu0 0.0
    %1081 = vmatpush1.msra.mxu0 %v1068
    %1082 = vmatprep.subr.mxu0 0.0
    %1083 = vmatpush1.msra.mxu0 %v1069
    %1084 = vmatprep.subr.mxu0 0.0
    %1085 = vmatpush1.msra.mxu0 %v1070
    %1086 = vmatprep.subr.mxu0 0.0
    %1087 = vmatpush1.msra.mxu0 0.0
    %1088 = vmatprep.subr.mxu0 0.0
    %1089 = vmatpush1.msra.mxu0 0.0
    %1090 = vmatprep.subr.mxu0 0.0
    %1091 = vmatpush1.msra.mxu0 0.0
    %1092 = vmatprep.subr.mxu0 0.0
    %1093 = vmatpush1.msra.mxu0 0.0
    %1094 = vmatprep.subr.mxu0 0.0
    %1095 = vmatpush1.msra.mxu0 0.0
    %1096 = vmatprep.subr.mxu0 0.0
    %1097 = vmatpush1.msra.mxu0 0.0
    %1098 = vmatprep.subr.mxu0 0.0
    %1099 = vmatpush1.msra.mxu0 0.0
    %1100 = vmatprep.subr.mxu0 0.0
    %1101 = vmatpush1.msra.mxu0 0.0
    %1102 = vmatprep.subr.mxu0 0.0
    %1103 = vmatpush1.msra.mxu0 0.0
    %1104 = vmatprep.subr.mxu0 0.0
    %1105 = vmatpush1.msra.mxu0 0.0
    %1106 = vmatprep.subr.mxu0 0.0
    %1107 = vmatpush1.msra.mxu0 0.0
    %1108 = vmatprep.subr.mxu0 0.0
    %1109 = vmatpush1.msra.mxu0 0.0
    %1110 = vmatprep.subr.mxu0 0.0
    %1111 = vmatpush1.msra.mxu0 0.0
    %1112 = vmatprep.subr.mxu0 0.0
    %1113 = vmatpush1.msra.mxu0 0.0
    %1114 = vmatprep.subr.mxu0 0.0
    %1115 = vmatpush1.msra.mxu0 0.0
    %1116 = vmatprep.subr.mxu0 0.0
    %1117 = vmatpush1.msra.mxu0 0.0
    %1118 = vmatprep.subr.mxu0 0.0
    %1119 = vmatpush1.msra.mxu0 0.0
    %1120 = vmatprep.subr.mxu0 0.0
    %1121 = vmatpush1.msra.mxu0 0.0
    %1122 = vmatprep.subr.mxu0 0.0
    %1123 = vmatpush1.msra.mxu0 0.0
    %1124 = vmatprep.subr.mxu0 0.0
    %1125 = vmatpush1.msra.mxu0 0.0
    %1126 = vmatprep.subr.mxu0 0.0
    %1127 = vmatpush1.msra.mxu0 0.0
    %1128 = vmatprep.subr.mxu0 0.0
    %1129 = vmatpush1.msra.mxu0 0.0
    %1130 = vmatprep.subr.mxu0 0.0
    %1131 = vmatpush1.msra.mxu0 0.0
    %1132 = vmatprep.subr.mxu0 0.0
    %1133 = vmatpush1.msra.mxu0 0.0
    %1134 = vmatprep.subr.mxu0 0.0
    %1135 = vmatpush1.msra.mxu0 0.0
    %1136 = vmatprep.subr.mxu0 0.0
    %1137 = vmatpush1.msra.mxu0 0.0
    %1138 = vmatprep.subr.mxu0 0.0
    %1139 = vmatpush1.msra.mxu0 0.0
    %1140 = vmatprep.subr.mxu0 0.0
    %1141 = vmatpush1.msra.mxu0 0.0
    %1142 = vmatprep.mubr.f32.mxu0 0.0
    %1143 = vmatmul.mubr.f32.gmra.mrb[0].mxu0 %v1076
    %v1144 = vpop.f32.mrb[0].mxu0
    %v1145 = vadd.f32 0.0, %v1144
    %v1146 = vpop.f32.mrb[0].mxu0
    %1147 = vdwg.mxu0
    %v1148 = vadd.f32 %v1065, %v1145
    %s1149 = scalar_lea.vmem [#allocation2], 128
    %v1150 = vld [vmem:[%s1149] sm:$0xff]
    %v1151 = vld [vmem:[%s1149 + $0x8] sm:$0xff]
    %v1152 = vld [vmem:[%s1149 + $0x10] sm:$0xff]
    %v1153 = vld [vmem:[%s1149 + $0x18] sm:$0xff]
    %v1156 = vsel %vm817, %v766, %v759
    %v1157 = vsel %vm819, %v801, %v1156
    %v1158 = vsel %vm821, %v808, %v1157
    %v1159 = vsel %vm610, %v1158, 0
    %1161 = vmatprep.subr.mxu0 0.0
    %1162 = vmatpush1.msra.mxu0 %v1150
    %1163 = vmatprep.subr.mxu0 0.0
    %1164 = vmatpush1.msra.mxu0 %v1151
    %1165 = vmatprep.subr.mxu0 0.0
    %1166 = vmatpush1.msra.mxu0 %v1152
    %1167 = vmatprep.subr.mxu0 0.0
    %1168 = vmatpush1.msra.mxu0 %v1153
    %1169 = vmatprep.subr.mxu0 0.0
    %1170 = vmatpush1.msra.mxu0 0.0
    %1171 = vmatprep.subr.mxu0 0.0
    %1172 = vmatpush1.msra.mxu0 0.0
    %1173 = vmatprep.subr.mxu0 0.0
    %1174 = vmatpush1.msra.mxu0 0.0
    %1175 = vmatprep.subr.mxu0 0.0
    %1176 = vmatpush1.msra.mxu0 0.0
    %1177 = vmatprep.subr.mxu0 0.0
    %1178 = vmatpush1.msra.mxu0 0.0
    %1179 = vmatprep.subr.mxu0 0.0
    %1180 = vmatpush1.msra.mxu0 0.0
    %1181 = vmatprep.subr.mxu0 0.0
    %1182 = vmatpush1.msra.mxu0 0.0
    %1183 = vmatprep.subr.mxu0 0.0
    %1184 = vmatpush1.msra.mxu0 0.0
    %1185 = vmatprep.subr.mxu0 0.0
    %1186 = vmatpush1.msra.mxu0 0.0
    %1187 = vmatprep.subr.mxu0 0.0
    %1188 = vmatpush1.msra.mxu0 0.0
    %1189 = vmatprep.subr.mxu0 0.0
    %1190 = vmatpush1.msra.mxu0 0.0
    %1191 = vmatprep.subr.mxu0 0.0
    %1192 = vmatpush1.msra.mxu0 0.0
    %1193 = vmatprep.subr.mxu0 0.0
    %1194 = vmatpush1.msra.mxu0 0.0
    %1195 = vmatprep.subr.mxu0 0.0
    %1196 = vmatpush1.msra.mxu0 0.0
    %1197 = vmatprep.subr.mxu0 0.0
    %1198 = vmatpush1.msra.mxu0 0.0
    %1199 = vmatprep.subr.mxu0 0.0
    %1200 = vmatpush1.msra.mxu0 0.0
    %1201 = vmatprep.subr.mxu0 0.0
    %1202 = vmatpush1.msra.mxu0 0.0
    %1203 = vmatprep.subr.mxu0 0.0
    %1204 = vmatpush1.msra.mxu0 0.0
    %1205 = vmatprep.subr.mxu0 0.0
    %1206 = vmatpush1.msra.mxu0 0.0
    %1207 = vmatprep.subr.mxu0 0.0
    %1208 = vmatpush1.msra.mxu0 0.0
    %1209 = vmatprep.subr.mxu0 0.0
    %1210 = vmatpush1.msra.mxu0 0.0
    %1211 = vmatprep.subr.mxu0 0.0
    %1212 = vmatpush1.msra.mxu0 0.0
    %1213 = vmatprep.subr.mxu0 0.0
    %1214 = vmatpush1.msra.mxu0 0.0
    %1215 = vmatprep.subr.mxu0 0.0
    %1216 = vmatpush1.msra.mxu0 0.0
    %1217 = vmatprep.subr.mxu0 0.0
    %1218 = vmatpush1.msra.mxu0 0.0
    %1219 = vmatprep.subr.mxu0 0.0
    %1220 = vmatpush1.msra.mxu0 0.0
    %1221 = vmatprep.subr.mxu0 0.0
    %1222 = vmatpush1.msra.mxu0 0.0
    %1223 = vmatprep.subr.mxu0 0.0
    %1224 = vmatpush1.msra.mxu0 0.0
    %1225 = vmatprep.mubr.f32.mxu0 0.0
    %1226 = vmatmul.mubr.f32.gmra.mrb[0].mxu0 %v1159
    %v1227 = vpop.f32.mrb[0].mxu0
    %v1228 = vadd.f32 0.0, %v1227
    %v1229 = vpop.f32.mrb[0].mxu0
    %1230 = vdwg.mxu0
    %v1231 = vadd.f32 %v1148, %v1228
    %v1232 = vmax.f32 %v1231, 0.0
    %vm1233 = vcmask 257024
    %v1234 = vsel %vm1233, %v1232, 0.0
    %v1235 = vrot.slane %v1234, 4
    %v1236 = vadd.f32 %v1234, %v1235
    %v1237 = vrot.slane %v1236, 2
    %v1238 = vadd.f32 %v1236, %v1237
    %v1239 = vrot.slane %v1238, 1
    %v1240 = vadd.f32 %v1238, %v1239
    %v1241 = vmul.f32 %v1240, 0.25
    %v1242 = vsub.f32 %v1232, %v1241
    %v1243 = vmul.f32 %v1242, %v1242
    %v1244 = vsel %vm1233, %v1243, 0.0
    %v1245 = vrot.slane %v1244, 4
    %v1246 = vadd.f32 %v1244, %v1245
    %v1247 = vrot.slane %v1246, 2
    %v1248 = vadd.f32 %v1246, %v1247
    %v1249 = vrot.slane %v1248, 1
    %v1250 = vadd.f32 %v1248, %v1249
    %v1251 = vmul.f32 %v1250, 0.25
    %v1252 = vadd.f32 %v1251, 1e-05
    %v1253 = vrsqrt.pop %v1252
    %v1254 = vmul.f32 %v35, %v1253
    %v1255 = vlaneseq
    %v1256 = vshrl.u32 %v1255, 7
    %v1257 = vsub.s32 4, %v1256
    %v1258 = vrot.slane %v1254, %v1257
    %v1259 = vmul.f32 %v1242, %v1258
    %v1260 = vlaneseq
    %v1261 = vshrl.u32 %v1260, 7
    %v1262 = vsub.s32 5, %v1261
    %v1263 = vrot.slane %v35, %v1262
    %v1264 = vadd.f32 %v1259, %v1263
    %v1265 = vld [vmem:[%s3] sm:$0xff]
    %v1266 = vld [vmem:[%s3 + $0x8] sm:$0xff]
    %v1267 = vld [vmem:[%s3 + $0x10] sm:$0xff]
    %v1268 = vld [vmem:[%s3 + $0x18] sm:$0xff]
    %v1269 = vlaneseq
    %v1270 = vshrl.u32 %v1269, 7
    %v1271 = vsub.s32 6, %v1270
    %v1272 = vrot.slane %v35, %v1271
    %v1274 = vsel %vm610, %v1264, 0
    %1276 = vmatprep.subr.mxu0 0.0
    %1277 = vmatpush1.msra.mxu0 %v1265
    %1278 = vmatprep.subr.mxu0 0.0
    %1279 = vmatpush1.msra.mxu0 %v1266
    %1280 = vmatprep.subr.mxu0 0.0
    %1281 = vmatpush1.msra.mxu0 %v1267
    %1282 = vmatprep.subr.mxu0 0.0
    %1283 = vmatpush1.msra.mxu0 %v1268
    %1284 = vmatprep.subr.mxu0 0.0
    %1285 = vmatpush1.msra.mxu0 0.0
    %1286 = vmatprep.subr.mxu0 0.0
    %1287 = vmatpush1.msra.mxu0 0.0
    %1288 = vmatprep.subr.mxu0 0.0
    %1289 = vmatpush1.msra.mxu0 0.0
    %1290 = vmatprep.subr.mxu0 0.0
    %1291 = vmatpush1.msra.mxu0 0.0
    %1292 = vmatprep.subr.mxu0 0.0
    %1293 = vmatpush1.msra.mxu0 0.0
    %1294 = vmatprep.subr.mxu0 0.0
    %1295 = vmatpush1.msra.mxu0 0.0
    %1296 = vmatprep.subr.mxu0 0.0
    %1297 = vmatpush1.msra.mxu0 0.0
    %1298 = vmatprep.subr.mxu0 0.0
    %1299 = vmatpush1.msra.mxu0 0.0
    %1300 = vmatprep.subr.mxu0 0.0
    %1301 = vmatpush1.msra.mxu0 0.0
    %1302 = vmatprep.subr.mxu0 0.0
    %1303 = vmatpush1.msra.mxu0 0.0
    %1304 = vmatprep.subr.mxu0 0.0
    %1305 = vmatpush1.msra.mxu0 0.0
    %1306 = vmatprep.subr.mxu0 0.0
    %1307 = vmatpush1.msra.mxu0 0.0
    %1308 = vmatprep.subr.mxu0 0.0
    %1309 = vmatpush1.msra.mxu0 0.0
    %1310 = vmatprep.subr.mxu0 0.0
    %1311 = vmatpush1.msra.mxu0 0.0
    %1312 = vmatprep.subr.mxu0 0.0
    %1313 = vmatpush1.msra.mxu0 0.0
    %1314 = vmatprep.subr.mxu0 0.0
    %1315 = vmatpush1.msra.mxu0 0.0
    %1316 = vmatprep.subr.mxu0 0.0
    %1317 = vmatpush1.msra.mxu0 0.0
    %1318 = vmatprep.subr.mxu0 0.0
    %1319 = vmatpush1.msra.mxu0 0.0
    %1320 = vmatprep.subr.mxu0 0.0
    %1321 = vmatpush1.msra.mxu0 0.0
    %1322 = vmatprep.subr.mxu0 0.0
    %1323 = vmatpush1.msra.mxu0 0.0
    %1324 = vmatprep.subr.mxu0 0.0
    %1325 = vmatpush1.msra.mxu0 0.0
    %1326 = vmatprep.subr.mxu0 0.0
    %1327 = vmatpush1.msra.mxu0 0.0
    %1328 = vmatprep.subr.mxu0 0.0
    %1329 = vmatpush1.msra.mxu0 0.0
    %1330 = vmatprep.subr.mxu0 0.0
    %1331 = vmatpush1.msra.mxu0 0.0
    %1332 = vmatprep.subr.mxu0 0.0
    %1333 = vmatpush1.msra.mxu0 0.0
    %1334 = vmatprep.subr.mxu0 0.0
    %1335 = vmatpush1.msra.mxu0 0.0
    %1336 = vmatprep.subr.mxu0 0.0
    %1337 = vmatpush1.msra.mxu0 0.0
    %1338 = vmatprep.subr.mxu0 0.0
    %1339 = vmatpush1.msra.mxu0 0.0
    %1340 = vmatprep.mubr.f32.mxu0 0.0
    %1341 = vmatmul.mubr.f32.gmra.mrb[0].mxu0 %v1274
    %v1342 = vpop.f32.mrb[0].mxu0
    %v1343 = vadd.f32 %v1272, %v1342
    %v1344 = vpop.f32.mrb[0].mxu0
    %1345 = vdwg.mxu0
    %v1348 = vunpack.c.l.s4 1983009808
    %v1349 = vunpack.c.0.s8 %v1348
    %v1350 = vlaneseq
    %v1351 = vshrl.u32 %v1350, 7
    %v1352 = vsub.s32 %v1349, %v1351
    %v1353 = vrot.slane %v1343, %v1352
    %v1354 = vcombine.high %v1353, %v1353
    %vm1357 = vcmask 66624
    %v1358 = vsel %vm1357, %v1353, -inf
    %v1359 = vrot.slane %v1358, 4
    %v1360 = vmax.f32 %v1358, %v1359
    %v1361 = vrot.slane %v1360, 2
    %v1362 = vmax.f32 %v1360, %v1361
    %v1363 = vrot.slane %v1362, 1
    %v1364 = vmax.f32 %v1362, %v1363
    %v1365 = vsel %vm1357, %v1354, -inf
    %v1366 = vrot.slane %v1365, 4
    %v1367 = vmax.f32 %v1365, %v1366
    %v1368 = vrot.slane %v1367, 2
    %v1369 = vmax.f32 %v1367, %v1368
    %v1370 = vrot.slane %v1369, 1
    %v1371 = vmax.f32 %v1369, %v1370
    %v1372 = vsub.f32 %v1353, %v1364
    %v1373 = vsub.f32 %v1354, %v1371
    %v1374 = vmul.f32 %v1372, 1.442695
    %v1375 = vpow.pop %v1374
    %v1376 = vmul.f32 %v1373, 1.442695
    %v1377 = vpow.pop %v1376
    %v1378 = vsel %vm1357, %v1375, 0.0
    %v1379 = vrot.slane %v1378, 4
    %v1380 = vadd.f32 %v1378, %v1379
    %v1381 = vrot.slane %v1380, 2
    %v1382 = vadd.f32 %v1380, %v1381
    %v1383 = vrot.slane %v1382, 1
    %v1384 = vadd.f32 %v1382, %v1383
    %v1385 = vsel %vm1357, %v1377, 0.0
    %v1386 = vrot.slane %v1385, 4
    %v1387 = vadd.f32 %v1385, %v1386
    %v1388 = vrot.slane %v1387, 2
    %v1389 = vadd.f32 %v1387, %v1388
    %v1390 = vrot.slane %v1389, 1
    %v1391 = vadd.f32 %v1389, %v1390
    %v1392 = vrcp.pop %v1384
    %v1393 = vmul.f32 %v1375, %v1392
    %v1394 = vrcp.pop %v1391
    %v1395 = vmul.f32 %v1377, %v1394
    %1397 = vset.pattern.permute.xlu0 8
    %1398 = vperm.xlu0 %1397, %v1393
    %v1399 = vpop.permute.xlu0 %1398
    %v1402 = vunpack.c.l.s4 269488144
    %v1403 = vunpack.c.0.s8 %v1402
    %v1404 = vlaneseq
    %v1405 = vshrl.u32 %v1404, 7
    %v1406 = vsub.s32 %v1403, %v1405
    %v1407 = vrot.slane %v1399, %v1406
    %1409 = vset.pattern.permute.xlu0 8
    %1410 = vperm.xlu0 %1409, %v1395
    %v1411 = vpop.permute.xlu0 %1410
    %v1414 = vunpack.c.l.s4 269488144
    %v1415 = vunpack.c.0.s8 %v1414
    %v1416 = vlaneseq
    %v1417 = vshrl.u32 %v1416, 7
    %v1418 = vsub.s32 %v1415, %v1417
    %v1419 = vrot.slane %v1411, %v1418
    %v1420 = vmul.f32 %v1353, %v1407
    %v1421 = vmul.f32 %v1354, %v1419
    %vm1422 = vcmask 58368
    %v1423 = vsel %vm1422, %v1420, 0.0
    %v1424 = vrot.slane %v1423, 4
    %v1425 = vadd.f32 %v1423, %v1424
    %v1426 = vrot.slane %v1425, 2
    %v1427 = vadd.f32 %v1425, %v1426
    %v1428 = vrot.slane %v1427, 1
    %v1429 = vadd.f32 %v1427, %v1428
    %v1430 = vsel %vm1422, %v1421, 0.0
    %v1431 = vrot.slane %v1430, 4
    %v1432 = vadd.f32 %v1430, %v1431
    %v1433 = vrot.slane %v1432, 2
    %v1434 = vadd.f32 %v1432, %v1433
    %v1435 = vrot.slane %v1434, 1
    %v1436 = vadd.f32 %v1434, %v1435
    %v1437 = vmul.f32 %v1429, 0.5
    %v1438 = vmul.f32 %v1436, 0.5
    %v1441 = vsel %vm817, %v1438, %v1437
    %1443 = vst.msk [vmem:[#allocation5] sm:$0x3] %vm1422, %v1441
    // Predicated region
    $region26: #{tpu_custom_call.1} parent=1 // pred_check
      _
    $region27: #{tpu_custom_call.1} parent=1 // pred_check_branch
      %1445 = sbr.rel (0) target = $region29
    $region28: #{tpu_custom_call.1} parent=1 // pred_region
      %s1447 = ssub.s32 32, 32
      %1448 = vsyncadd [#allocation4], %s1447
      %s1450 = sshll.u32 [#allocation5], 4
      %s1451 = int_to_ptr.vmem [resolvable:$true] %s1450
      %1453 = dma.vmem_to_hbm [thread:$0]  %s1451, 32, %s5, [#allocation4]
    $region29: #{tpu_custom_call.1} parent=1 // pred_fallthru
      _
    // Predicated region
    $region30: #{tpu_custom_call.1} parent=1 // pred_check
      _
    $region31: #{tpu_custom_call.1} parent=1 // pred_check_branch
      %1455 = sbr.rel (0) target = $region33
    $region32: #{tpu_custom_call.1} parent=1 // pred_region
      %1456 = dma.done [#allocation4], 32
    $region33: #{tpu_custom_call.1} parent=1 // pred_fallthru
      _
    %1457 = vsyncpa [#allocation3], 1
    %1458 = vsyncpa [#allocation4], 1

</llo_original>
